<compile_context>
chip_gen: v7x
topology: tpu7x:2x2x1
jax: 0.10.0
libtpu: 0.0.40
codegen_flags: <defaults>
</compile_context>

<pallas_src>
import numpy as np
import jax
import jax.numpy as jnp
from jax.experimental import pallas as pl
from jax.experimental.pallas import tpu as pltpu

_SOD_SIZE = 320
_MEAN = np.array([0.485, 0.456, 0.406], dtype=np.float32)
_STD = np.array([0.229, 0.224, 0.225], dtype=np.float32)


# ---------------------------------------------------------------------------
# Bilinear interpolation matrices (PyTorch semantics, align_corners=False)
# ---------------------------------------------------------------------------
def _bilinear_matrix(in_size: int, out_size: int) -> np.ndarray:
    """(out_size, in_size) matrix M s.t. M @ v == 1-D bilinear resize of v,
    matching F.interpolate(mode='bilinear', align_corners=False)."""
    m = np.zeros((out_size, in_size), dtype=np.float64)
    scale = in_size / out_size
    for i in range(out_size):
        src = (i + 0.5) * scale - 0.5
        src = max(src, 0.0)                      # PyTorch clamps negative source idx
        i0 = min(int(np.floor(src)), in_size - 1)
        i1 = min(i0 + 1, in_size - 1)
        t = src - i0
        m[i, i0] += 1.0 - t
        m[i, i1] += t
    return m.astype(np.float32)


# ---------------------------------------------------------------------------
# Kernel 1: bilinear (H,W)->(S,S) + fused (x - mean)/std, one (batch, channel)
# plane per grid step.
# ---------------------------------------------------------------------------
def _pre_kernel(x_ref, dh_ref, dwt_ref, a_ref, b_ref, o_ref):
    # x_ref:   (1,1,H,W) f32   input plane
    # dh_ref:  (S,H)     bf16  H-resize matrix
    # dwt_ref: (W,S)     bf16  W-resize matrix (transposed)
    # a_ref:   (3,)      f32   SMEM per-channel 1/std
    # b_ref:   (3,)      f32   SMEM per-channel -mean/std
    # o_ref:   (1,1,S,S) f32
    c = pl.program_id(1)
    xin = x_ref[0, 0].astype(jnp.bfloat16)                                  # (H,W)
    t = jnp.dot(dh_ref[...], xin, preferred_element_type=jnp.float32)       # (S,W) f32
    r = jnp.dot(t.astype(jnp.bfloat16), dwt_ref[...],
                preferred_element_type=jnp.float32)                         # (S,S) f32
    a = a_ref[c]
    b = b_ref[c]
    o_ref[0, 0] = r * a + b


# ---------------------------------------------------------------------------
# Kernel 2: bilinear (S,S)->(H,W) + fused per-image min/max reduction,
# one batch element per grid step (outputs per-image min/max, combined in glue).
# ---------------------------------------------------------------------------
def _up_minmax_kernel(m_ref, uh_ref, uwt_ref, o_ref, mn_ref, mx_ref):
    # m_ref:  (1,1,S,S) f32   SOD map
    # uh_ref: (H,S)     bf16  H-resize matrix
    # uwt_ref:(S,W)     bf16  W-resize matrix (transposed)
    # o_ref:  (1,1,H,W) f32   upsampled map
    # mn_ref: (1,1,1)   f32   per-image min
    # mx_ref: (1,1,1)   f32   per-image max
    sm16 = m_ref[0, 0].astype(jnp.bfloat16)                                 # (S,S)
    t = jnp.dot(uh_ref[...], sm16, preferred_element_type=jnp.float32)      # (H,S)
    up = jnp.dot(t.astype(jnp.bfloat16), uwt_ref[...],
                 preferred_element_type=jnp.float32)                        # (H,W)
    o_ref[0, 0] = up
    mn_ref[0] = jnp.min(jnp.min(up, axis=1, keepdims=True), axis=0, keepdims=True)
    mx_ref[0] = jnp.max(jnp.max(up, axis=1, keepdims=True), axis=0, keepdims=True)


# ---------------------------------------------------------------------------
# Kernel 3: global min-max normalization
# ---------------------------------------------------------------------------
def _minmax_norm_kernel(mn_ref, inv_ref, x_ref, o_ref):
    # mn_ref / inv_ref: (1,) f32 SMEM scalars (global min, 1/(max-min))
    o_ref[...] = (x_ref[...] - mn_ref[0]) * inv_ref[0]


# ---------------------------------------------------------------------------
# Wrapper
# ---------------------------------------------------------------------------
def _compiler_params(semantics, bytes_per_step):
    # Double-buffered blocks + slack, clamped to a budget that is safe on
    # v5e / v6e (128 MiB physical) and v7x (64 MiB physical).
    limit = int(min(max(2 * bytes_per_step + (8 << 20), 32 << 20), 64 << 20))
    return pltpu.CompilerParams(dimension_semantics=semantics,
                                vmem_limit_bytes=limit)


def sod_u2net_forward(x: jax.Array, sod_model_fn) -> jax.Array:
    """SodU2Net.forward: x (N,3,H,W) f32 -> weight map (N,1,H,W) f32 in [0,1].

    `sod_model_fn` maps the normalized (N,3,320,320) input to a (N,1,320,320)
    saliency map (the first output of U^2-Net in the PyTorch module)."""
    n, c, h, w = x.shape
    assert c == 3, "input must have 3 channels"
    s = _SOD_SIZE

    # Resize operators in bf16 (MXU native throughput; halves matrix VMEM/DMA).
    dh = jnp.asarray(_bilinear_matrix(h, s), dtype=jnp.bfloat16)        # (S,H)
    dwt = jnp.asarray(_bilinear_matrix(w, s).T, dtype=jnp.bfloat16)     # (W,S)
    uh = jnp.asarray(_bilinear_matrix(s, h), dtype=jnp.bfloat16)        # (H,S)
    uwt = jnp.asarray(_bilinear_matrix(s, w).T, dtype=jnp.bfloat16)     # (S,W)

    a = jnp.asarray(1.0 / _STD, dtype=jnp.float32)                      # 1/std
    b = jnp.asarray(-_MEAN / _STD, dtype=jnp.float32)                   # -mean/std

    # --- kernel 1: downsample + normalize, grid over (batch, channel) ----------
    pre_bytes = h * w * 4 + s * h * 2 + w * s * 2 + s * s * 4
    pre = pl.pallas_call(
        _pre_kernel,
        out_shape=jax.ShapeDtypeStruct((n, 3, s, s), jnp.float32),
        grid_spec=pltpu.PrefetchScalarGridSpec(
            num_scalar_prefetch=0,
            grid=(n, 3),
            in_specs=[
                pl.BlockSpec((1, 1, h, w), lambda i, j: (i, j, 0, 0)),
                pl.BlockSpec((s, h), lambda i, j: (0, 0)),
                pl.BlockSpec((w, s), lambda i, j: (0, 0)),
                pl.BlockSpec(memory_space=pltpu.MemorySpace.SMEM),
                pl.BlockSpec(memory_space=pltpu.MemorySpace.SMEM),
            ],
            out_specs=pl.BlockSpec((1, 1, s, s), lambda i, j: (i, j, 0, 0)),
        ),
        compiler_params=_compiler_params(("parallel", "parallel"), pre_bytes),
        cost_estimate=pl.CostEstimate(
            flops=2 * n * 3 * (s * h * w + s * s * w),
            transcendentals=0,
            bytes_accessed=n * 3 * (h * w + s * s) * 4 + (s * h + w * s) * 2,
        ),
    )(x, dh, dwt, a, b)

    # --- U^2-Net backbone -------------------------------------------------------
    # TODO(synk): the pretrained sod.U2NET/U2NETP backbone (weights loaded from
    # model_file) has no self-contained Pallas equivalent; it is injected here.
    sod_map = sod_model_fn(pre).astype(jnp.float32)                     # (N,1,S,S)

    # --- kernel 2: upsample + per-image min/max --------------------------------
    up_bytes = s * s * 4 + h * s * 2 + s * w * 2 + h * w * 4
    up, mn_b, mx_b = pl.pallas_call(
        _up_minmax_kernel,
        out_shape=(
            jax.ShapeDtypeStruct((n, 1, h, w), jnp.float32),
            jax.ShapeDtypeStruct((n, 1, 1), jnp.float32),
            jax.ShapeDtypeStruct((n, 1, 1), jnp.float32),
        ),
        grid_spec=pltpu.PrefetchScalarGridSpec(
            num_scalar_prefetch=0,
            grid=(n,),
            in_specs=[
                pl.BlockSpec((1, 1, s, s), lambda i: (i, 0, 0, 0)),
                pl.BlockSpec((h, s), lambda i: (0, 0)),
                pl.BlockSpec((s, w), lambda i: (0, 0)),
            ],
            out_specs=[
                pl.BlockSpec((1, 1, h, w), lambda i: (i, 0, 0, 0)),
                pl.BlockSpec((1, 1, 1), lambda i: (i, 0, 0)),
                pl.BlockSpec((1, 1, 1), lambda i: (i, 0, 0)),
            ],
        ),
        compiler_params=_compiler_params(("parallel",), up_bytes),
        cost_estimate=pl.CostEstimate(
            flops=2 * n * (h * s * s + h * s * w),
            transcendentals=0,
            bytes_accessed=n * (s * s + h * w) * 4 + (h * s + s * w) * 2,
        ),
    )(sod_map, uh, uwt)

    # Combine per-image partial reductions into global scalars (trivial glue).
    mn = jnp.min(mn_b)
    mx = jnp.max(mx_b)
    mn_s = mn.reshape(1)
    inv_s = (1.0 / (mx - mn)).reshape(1)

    # --- kernel 3: global min-max normalization --------------------------------
    norm_bytes = 2 * h * w * 4
    out = pl.pallas_call(
        _minmax_norm_kernel,
        out_shape=jax.ShapeDtypeStruct((n, 1, h, w), jnp.float32),
        grid_spec=pltpu.PrefetchScalarGridSpec(
            num_scalar_prefetch=0,
            grid=(n,),
            in_specs=[
                pl.BlockSpec(memory_space=pltpu.MemorySpace.SMEM),
                pl.BlockSpec(memory_space=pltpu.MemorySpace.SMEM),
                pl.BlockSpec((1, 1, h, w), lambda i: (i, 0, 0, 0)),
            ],
            out_specs=pl.BlockSpec((1, 1, h, w), lambda i: (i, 0, 0, 0)),
        ),
        compiler_params=_compiler_params(("parallel",), norm_bytes),
        cost_estimate=pl.CostEstimate(
            flops=2 * n * h * w,
            transcendentals=0,
            bytes_accessed=2 * n * h * w * 4,
        ),
    )(mn_s, inv_s, up)

    return out


# ---------------------------------------------------------------------------
# Stand-in for the pretrained U^2-Net (so the pipeline can be exercised)
# ---------------------------------------------------------------------------
def _placeholder_sod_model(x320: jax.Array) -> jax.Array:
    # TODO(synk): replace with a real U^2-Net forward + pretrained weights.
    return jax.nn.sigmoid(jnp.mean(x320, axis=1, keepdims=True))


# ---------------------------------------------------------------------------
# Pure-JAX reference mirroring the kernel's bf16/f32 precision choices
# ---------------------------------------------------------------------------
def _reference(x, sod_model_fn):
    n, c, h, w = x.shape
    s = _SOD_SIZE
    dh = jnp.asarray(_bilinear_matrix(h, s), jnp.bfloat16)
    dwt = jnp.asarray(_bilinear_matrix(w, s).T, jnp.bfloat16)
    uh = jnp.asarray(_bilinear_matrix(s, h), jnp.bfloat16)
    uwt = jnp.asarray(_bilinear_matrix(s, w).T, jnp.bfloat16)
    a = jnp.asarray(1.0 / _STD, jnp.float32)
    b = jnp.asarray(-_MEAN / _STD, jnp.float32)

    def resize(img, mh, mwt):
        t = jnp.dot(mh, img.astype(jnp.bfloat16), preferred_element_type=jnp.float32)
        return jnp.dot(t.astype(jnp.bfloat16), mwt, preferred_element_type=jnp.float32)

    pre = jnp.stack([
        jnp.stack([resize(x[ni, ci], dh, dwt) * a[ci] + b[ci] for ci in range(3)])
        for ni in range(n)])
    sm = sod_model_fn(pre).astype(jnp.float32)
    up = jnp.stack([resize(sm[ni, 0], uh, uwt) for ni in range(n)])[:, None]
    mn = jnp.min(up)
    mx = jnp.max(up)
    return (up - mn) / (mx - mn)


if __name__ == "__main__":
    key = jax.random.PRNGKey(0)
    N, C, H, W = 2, 3, 16, 16
    x = jax.random.uniform(key, (N, C, H, W), dtype=jnp.float32)

    out = sod_u2net_forward(x, _placeholder_sod_model)
    out = jax.block_until_ready(out)
    assert out.shape == (N, 1, H, W)

    ref = _reference(x, _placeholder_sod_model)
    np.testing.assert_allclose(np.asarray(out), np.asarray(ref), rtol=1e-2, atol=1e-2)

    print("KERNEL_OK")
</pallas_src>

<mosaic_0001>
module attributes {stable_mosaic.version = 11 : i64} {
  func.func @_pre_kernel(%arg0: i32, %arg1: i32, %arg2: memref<1x1x16x16xf32, #tpu.memory_space<vmem>>, %arg3: memref<320x16xbf16, #tpu.memory_space<vmem>>, %arg4: memref<16x320xbf16, #tpu.memory_space<vmem>>, %arg5: memref<3xf32, #tpu.memory_space<smem>>, %arg6: memref<3xf32, #tpu.memory_space<smem>>, %arg7: memref<1x1x320x320xf32, #tpu.memory_space<vmem>>) attributes {dimension_semantics = [#tpu.dimension_semantics<parallel>, #tpu.dimension_semantics<parallel>], iteration_bounds = array<i64: 2, 3>, scalar_prefetch = 0 : i64, scratch_operands = 0 : i64, tpu.core_type = #tpu.core_type<tc>, window_params = [{transform_indices = @transform_0, window_bounds = array<i64: 1, 1, 16, 16>}, {pipeline_mode = #tpu.pipeline_mode<synchronous>, transform_indices = @transform_1, window_bounds = array<i64: 320, 16>}, {pipeline_mode = #tpu.pipeline_mode<synchronous>, transform_indices = @transform_2, window_bounds = array<i64: 16, 320>}, {transform_indices = @transform_3, window_bounds = array<i64: 3>}, {transform_indices = @transform_4, window_bounds = array<i64: 3>}, {transform_indices = @transform_5, window_bounds = array<i64: 1, 1, 320, 320>}]} {
    %c0 = arith.constant 0 : index
    %c0_0 = arith.constant 0 : index
    %c0_1 = arith.constant 0 : index
    %c0_2 = arith.constant 0 : index
    %0 = vector.load %arg2[%c0, %c0_0, %c0_1, %c0_2] : memref<1x1x16x16xf32, #tpu.memory_space<vmem>>, vector<1x1x16x16xf32>
    %1 = vector.shape_cast %0 : vector<1x1x16x16xf32> to vector<16x16xf32>
    %2 = arith.truncf %1 : vector<16x16xf32> to vector<16x16xbf16>
    %c0_3 = arith.constant 0 : index
    %c0_4 = arith.constant 0 : index
    %3 = vector.load %arg3[%c0_3, %c0_4] : memref<320x16xbf16, #tpu.memory_space<vmem>>, vector<320x16xbf16>
    %cst = arith.constant dense<0.000000e+00> : vector<320x16xf32>
    %4 = tpu.matmul %3, %2, %cst {dimension_numbers = #tpu.dot_dimension_numbers<[1], [0], [0], [1], [0, 0, 1, 1], [], []>} : vector<320x16xbf16>, vector<16x16xbf16>, vector<320x16xf32> -> vector<320x16xf32>
    %5 = arith.truncf %4 : vector<320x16xf32> to vector<320x16xbf16>
    %c0_5 = arith.constant 0 : index
    %c0_6 = arith.constant 0 : index
    %6 = vector.load %arg4[%c0_5, %c0_6] : memref<16x320xbf16, #tpu.memory_space<vmem>>, vector<16x320xbf16>
    %cst_7 = arith.constant dense<0.000000e+00> : vector<320x320xf32>
    %7 = tpu.matmul %5, %6, %cst_7 {dimension_numbers = #tpu.dot_dimension_numbers<[1], [0], [0], [1], [0, 0, 1, 1], [], []>} : vector<320x16xbf16>, vector<16x320xbf16>, vector<320x320xf32> -> vector<320x320xf32>
    %8 = arith.index_cast %arg1 : i32 to index
    %9 = memref.load %arg5[%8] : memref<3xf32, #tpu.memory_space<smem>>
    %10 = arith.index_cast %arg1 : i32 to index
    %11 = memref.load %arg6[%10] : memref<3xf32, #tpu.memory_space<smem>>
    %12 = vector.broadcast %9 : f32 to vector<320x320xf32>
    %13 = arith.mulf %7, %12 : vector<320x320xf32>
    %14 = vector.broadcast %11 : f32 to vector<320x320xf32>
    %15 = arith.addf %13, %14 : vector<320x320xf32>
    %c0_8 = arith.constant 0 : index
    %c0_9 = arith.constant 0 : index
    %c0_10 = arith.constant 0 : index
    %c0_11 = arith.constant 0 : index
    %16 = vector.load %arg7[%c0_8, %c0_9, %c0_10, %c0_11] : memref<1x1x320x320xf32, #tpu.memory_space<vmem>>, vector<1x1x320x320xf32>
    %17 = vector.shape_cast %16 : vector<1x1x320x320xf32> to vector<320x320xf32>
    %18 = vector.shape_cast %15 : vector<320x320xf32> to vector<1x1x320x320xf32>
    tpu.vector_store %arg7[%c0_8, %c0_9, %c0_10, %c0_11], %18 {strides = array<i32>} : memref<1x1x320x320xf32, #tpu.memory_space<vmem>>, vector<1x1x320x320xf32>,
    return
  }
  func.func @transform_0(%arg0: i32, %arg1: i32) -> (i32, i32, i32, i32) {
    %c0_i32 = arith.constant 0 : i32
    %c0_i32_0 = arith.constant 0 : i32
    %c0_i32_1 = arith.constant 0 : i32
    return %arg0, %arg1, %c0_i32, %c0_i32_0 : i32, i32, i32, i32
  }
  func.func @transform_1(%arg0: i32, %arg1: i32) -> (i32, i32) {
    %c0_i32 = arith.constant 0 : i32
    %c0_i32_0 = arith.constant 0 : i32
    %c0_i32_1 = arith.constant 0 : i32
    return %c0_i32, %c0_i32_0 : i32, i32
  }
  func.func @transform_2(%arg0: i32, %arg1: i32) -> (i32, i32) {
    %c0_i32 = arith.constant 0 : i32
    %c0_i32_0 = arith.constant 0 : i32
    %c0_i32_1 = arith.constant 0 : i32
    return %c0_i32, %c0_i32_0 : i32, i32
  }
  func.func @transform_3(%arg0: i32, %arg1: i32) -> i32 {
    %c0_i32 = arith.constant 0 : i32
    %c0_i32_0 = arith.constant 0 : i32
    return %c0_i32 : i32
  }
  func.func @transform_4(%arg0: i32, %arg1: i32) -> i32 {
    %c0_i32 = arith.constant 0 : i32
    %c0_i32_0 = arith.constant 0 : i32
    return %c0_i32 : i32
  }
  func.func @transform_5(%arg0: i32, %arg1: i32) -> (i32, i32, i32, i32) {
    %c0_i32 = arith.constant 0 : i32
    %c0_i32_0 = arith.constant 0 : i32
    %c0_i32_1 = arith.constant 0 : i32
    return %arg0, %arg1, %c0_i32, %c0_i32_0 : i32, i32, i32, i32
  }
}

</mosaic_0001>

<llo_original>
// kernel: tpu_custom_call.1
$region0: #{tpu_custom_call.1}
  #allocation0 [shape = 'u32[]', space=smem, size = 0x4, offset = 0x4, fixed_abs, tag = 'smem constant byte address 0x4 - core index']
  #allocation1 [shape = 'u32[144,128]{1,0:T(1,128)}', space=vmem, size = 0x12000, scoped, tag = 'internal scratch']
  %s0 = inlined_call_operand.hbm [shape: f32[2,3,16,16], index: 0, kind: input, shape index: {}]
  %s1 = inlined_call_operand.vmem [shape: bf16[320,16], index: 1, kind: input, shape index: {}]
  %s2 = inlined_call_operand.hbm [shape: bf16[16,320], index: 2, kind: input, shape index: {}]
  %s3 = inlined_call_operand.hbm [shape: f32[3], index: 3, kind: input, shape index: {}]
  %s4 = inlined_call_operand.hbm [shape: f32[3], index: 4, kind: input, shape index: {}]
  %s5 = inlined_call_operand.hbm [shape: f32[2,3,320,320], index: 5, kind: output, shape index: {}]
  %s6 = sld [smem:[#allocation0]]
  $region69: #{tpu_custom_call.1} parent=0
    _
  %s8 = ssub.s32 1, %s6
  %s9 = scalar_select 0, %s8, %s6
  $region1: #{tpu_custom_call.1} parent=0
    #allocation2 [shape = 'u8[16384]{0}', space=vmem, size = 0x4000, scoped, tag = 'input window, operand 0']
    #allocation3 [shape = 's32[2]{0}', space=sflag, size = 0x8, scoped, tag = 'scoped memory for tpu_custom_call.1']
    #allocation4 [shape = 's32[2]{0}', space=sflag, size = 0x8, scoped, tag = 'scoped memory for tpu_custom_call.1']
    #allocation5 [shape = 's32[2]{0}', space=sflag, size = 0x8, scoped, tag = 'scoped memory for tpu_custom_call.1']
    #allocation6 [shape = 'u8[12288]{0}', space=vmem, size = 0x3000, scoped, tag = 'input window, operand 2, single buffered']
    #allocation7 [shape = 's32[1]{0}', space=sflag, size = 0x4, scoped, tag = 'scoped memory for tpu_custom_call.1']
    #allocation8 [shape = 'u8[512]{0}', space=smem, size = 0x200, scoped, tag = 'input window, operand 3, single buffered']
    #allocation9 [shape = 'u8[512]{0}', space=smem, size = 0x200, scoped, tag = 'input window, operand 4, single buffered']
    #allocation10 [shape = 's32[1]{0}', space=sflag, size = 0x4, scoped, tag = 'scoped memory for tpu_custom_call.1']
    #allocation11 [shape = 'u8[983040]{0}', space=vmem, size = 0xf0000, scoped, tag = 'output window, operand 0']
    %10 = vsyncpa [#allocation3], 0
    %s11 = scalar_lea.sflag [#allocation3], 1
    %12 = vsyncpa %s11, 0
    %13 = vsyncpa [#allocation7], 0
    %14 = vsyncpa [#allocation5], 0
    %15 = vsyncpa [#allocation10], 0
    %16 = vsyncpa [#allocation4], 0
    %s17 = scalar_lea.sflag [#allocation4], 1
    %18 = vsyncpa %s17, 0
    loop: start=0, step=1, limit=8
    $region2: #{tpu_custom_call.1} parent=1 // loop_pre_header
      _
    $region3: #{tpu_custom_call.1} parent=1 // loop_header
      %s20 = sphi 0, %s24
      %p21 = scmp.ge.s32.totalorder %s20, 8
      %s27 = sphi 0, %s39
      %s28 = sphi 0, %s35
      %s29 = sphi 0, %s27
      %s30 = sphi 0, %s28
      %s31 = sphi 0, %s29
      %s32 = sphi 0, %s30
      %s44 = sphi 0, %s46
      %s47 = sphi 0, %s44
      %s48 = sphi 0, %s47
      %s64 = sphi 0, %s48
      %s68 = sphi 0, %s68
      %s70 = sphi 0, %s68
      %s71 = sphi 0, %s70
      %s85 = sphi 0, %s71
      %s89 = sphi 0, %s89
      %s91 = sphi 0, %s89
      %s92 = sphi 0, %s91
      %s106 = sphi 0, %s92
      %s110 = sphi 0, %s110
      %s112 = sphi 0, %s110
      %s113 = sphi 0, %s112
      %s127 = sphi 0, %s113
      %s131 = sphi 0, %s131
      %s133 = sphi 0, %s131
      %s134 = sphi 0, %s133
      %s148 = sphi 0, %s134
      %s156 = sphi 0, %s158
      %s159 = sphi 0, %s156
      %s160 = sphi 0, %s159
      %s176 = sphi 0, %s160
    $region4: #{tpu_custom_call.1} parent=1 // loop_header_branch
      %23 = sbr.rel (%p21) target = $region8
    $region5: #{tpu_custom_call.1} parent=1 // loop_body
      %s25 = ssub.s32 %s20, 1
      %s26 = ssub.s32 %s20, 2
      %s33 = sadd.s32 1, %s28
      %p34 = scmp.ge.s32.totalorder %s33, 3
      %s35 = scalar_select %p34, 0, %s33
      %s36 = sadd.s32 1, %s27
      %s37 = scalar_select %p34, %s36, %s27
      %p38 = scmp.ge.s32.totalorder %s37, 2
      %s39 = scalar_select %p38, 0, %s37
      %s40 = ssub.s32 %s27, %s39
      %s41 = ssub.s32 %s28, %s35
      %s42 = sor.u32 %s40, %s41
      %p43 = scmp.eq.s32.totalorder %s42, 0
      %s45 = sadd.s32 %s44, 1
      %s46 = scalar_select %p43, %s44, %s45
      %p49 = pneg %p43
      %p50 = scmp.eq.s32.totalorder %s20, 5
      %p51 = por %p49, %p50
      %p52 = scmp.ne.s32.totalorder %s44, %s47
      %p53 = scmp.eq.s32.totalorder %s20, 0
      %p54 = por %p52, %p53
      %p55 = scmp.ne.s32.totalorder %s44, %s47
      %p56 = scmp.eq.s32.totalorder %s25, 5
      %p57 = por %p55, %p56
      %p58 = scmp.ne.s32.totalorder %s47, %s48
      %p59 = scmp.eq.s32.totalorder %s25, 0
      %p60 = por %p58, %p59
      %p61 = scmp.ne.s32.totalorder %s47, %s48
      %p62 = scmp.eq.s32.totalorder %s26, 5
      %p63 = por %p61, %p62
      %p65 = scmp.ne.s32.totalorder %s48, %s64
      %p66 = scmp.eq.s32.totalorder %s26, 0
      %p67 = por %p65, %p66
      %s69 = sadd.s32 %s68, 1
      %p72 = scmp.eq.s32.totalorder %s20, 5
      %p73 = scmp.ne.s32.totalorder %s68, %s70
      %p74 = scmp.eq.s32.totalorder %s20, 0
      %p75 = por %p73, %p74
      %p76 = scmp.ne.s32.totalorder %s68, %s70
      %p77 = scmp.eq.s32.totalorder %s25, 5
      %p78 = por %p76, %p77
      %p79 = scmp.ne.s32.totalorder %s70, %s71
      %p80 = scmp.eq.s32.totalorder %s25, 0
      %p81 = por %p79, %p80
      %p82 = scmp.ne.s32.totalorder %s70, %s71
      %p83 = scmp.eq.s32.totalorder %s26, 5
      %p84 = por %p82, %p83
      %p86 = scmp.ne.s32.totalorder %s71, %s85
      %p87 = scmp.eq.s32.totalorder %s26, 0
      %p88 = por %p86, %p87
      %s90 = sadd.s32 %s89, 1
      %p93 = scmp.eq.s32.totalorder %s20, 5
      %p94 = scmp.ne.s32.totalorder %s89, %s91
      %p95 = scmp.eq.s32.totalorder %s20, 0
      %p96 = por %p94, %p95
      %p97 = scmp.ne.s32.totalorder %s89, %s91
      %p98 = scmp.eq.s32.totalorder %s25, 5
      %p99 = por %p97, %p98
      %p100 = scmp.ne.s32.totalorder %s91, %s92
      %p101 = scmp.eq.s32.totalorder %s25, 0
      %p102 = por %p100, %p101
      %p103 = scmp.ne.s32.totalorder %s91, %s92
      %p104 = scmp.eq.s32.totalorder %s26, 5
      %p105 = por %p103, %p104
      %p107 = scmp.ne.s32.totalorder %s92, %s106
      %p108 = scmp.eq.s32.totalorder %s26, 0
      %p109 = por %p107, %p108
      %s111 = sadd.s32 %s110, 1
      %p114 = scmp.eq.s32.totalorder %s20, 5
      %p115 = scmp.ne.s32.totalorder %s110, %s112
      %p116 = scmp.eq.s32.totalorder %s20, 0
      %p117 = por %p115, %p116
      %p118 = scmp.ne.s32.totalorder %s110, %s112
      %p119 = scmp.eq.s32.totalorder %s25, 5
      %p120 = por %p118, %p119
      %p121 = scmp.ne.s32.totalorder %s112, %s113
      %p122 = scmp.eq.s32.totalorder %s25, 0
      %p123 = por %p121, %p122
      %p124 = scmp.ne.s32.totalorder %s112, %s113
      %p125 = scmp.eq.s32.totalorder %s26, 5
      %p126 = por %p124, %p125
      %p128 = scmp.ne.s32.totalorder %s113, %s127
      %p129 = scmp.eq.s32.totalorder %s26, 0
      %p130 = por %p128, %p129
      %s132 = sadd.s32 %s131, 1
      %p135 = scmp.eq.s32.totalorder %s20, 5
      %p136 = scmp.ne.s32.totalorder %s131, %s133
      %p137 = scmp.eq.s32.totalorder %s20, 0
      %p138 = por %p136, %p137
      %p139 = scmp.ne.s32.totalorder %s131, %s133
      %p140 = scmp.eq.s32.totalorder %s25, 5
      %p141 = por %p139, %p140
      %p142 = scmp.ne.s32.totalorder %s133, %s134
      %p143 = scmp.eq.s32.totalorder %s25, 0
      %p144 = por %p142, %p143
      %p145 = scmp.ne.s32.totalorder %s133, %s134
      %p146 = scmp.eq.s32.totalorder %s26, 5
      %p147 = por %p145, %p146
      %p149 = scmp.ne.s32.totalorder %s134, %s148
      %p150 = scmp.eq.s32.totalorder %s26, 0
      %p151 = por %p149, %p150
      %s152 = ssub.s32 %s27, %s39
      %s153 = ssub.s32 %s28, %s35
      %s154 = sor.u32 %s152, %s153
      %p155 = scmp.eq.s32.totalorder %s154, 0
      %s157 = sadd.s32 %s156, 1
      %s158 = scalar_select %p155, %s156, %s157
      %p161 = pneg %p155
      %p162 = scmp.eq.s32.totalorder %s20, 5
      %p163 = por %p161, %p162
      %p164 = scmp.ne.s32.totalorder %s156, %s159
      %p165 = scmp.eq.s32.totalorder %s20, 0
      %p166 = por %p164, %p165
      %p167 = scmp.ne.s32.totalorder %s156, %s159
      %p168 = scmp.eq.s32.totalorder %s25, 5
      %p169 = por %p167, %p168
      %p170 = scmp.ne.s32.totalorder %s159, %s160
      %p171 = scmp.eq.s32.totalorder %s25, 0
      %p172 = por %p170, %p171
      %p173 = scmp.ne.s32.totalorder %s159, %s160
      %p174 = scmp.eq.s32.totalorder %s26, 5
      %p175 = por %p173, %p174
      %p177 = scmp.ne.s32.totalorder %s160, %s176
      %p178 = scmp.eq.s32.totalorder %s26, 0
      %p179 = por %p177, %p178
      %p180 = scmp.le.s32.totalorder 1, %s20
      %p181 = scmp.lt.s32.totalorder %s20, 7
      %p182 = pnand %p180, %p181
      %p183 = pneg %p182
      // Predicated region
      $region9: #{tpu_custom_call.1} parent=5 // pred_check
        _
      $region10: #{tpu_custom_call.1} parent=5 // pred_check_branch
        %185 = sbr.rel (%p182) target = $region12
      $region11: #{tpu_custom_call.1} parent=5 // pred_region
        %s186 = ssub.s32 %s20, 1
        // Predicated region
        $region13: #{tpu_custom_call.1} parent=11 // pred_check
          %p187 = pneg %p81
        $region14: #{tpu_custom_call.1} parent=11 // pred_check_branch
          %189 = sbr.rel (%p187) target = $region16
        $region15: #{tpu_custom_call.1} parent=11 // pred_region
          _
        $region16: #{tpu_custom_call.1} parent=11 // pred_fallthru
          _
        // Predicated region
        $region17: #{tpu_custom_call.1} parent=11 // pred_check
          %p190 = pneg %p102
        $region18: #{tpu_custom_call.1} parent=11 // pred_check_branch
          %192 = sbr.rel (%p190) target = $region20
        $region19: #{tpu_custom_call.1} parent=11 // pred_region
          %s194 = ssub.s32 384, 384
          %195 = vsyncadd [#allocation7], %s194
          %s196 = sshll.u32 [#allocation6], 4
          %s197 = int_to_ptr.vmem [resolvable:$true] %s196
          %202 = dma.hbm_to_vmem [thread:$0]  %s2, 384, %s197, [#allocation7], 192, 192, 12
        $region20: #{tpu_custom_call.1} parent=11 // pred_fallthru
          _
        // Predicated region
        $region21: #{tpu_custom_call.1} parent=11 // pred_check
          %p203 = pneg %p123
        $region22: #{tpu_custom_call.1} parent=11 // pred_check_branch
          %205 = sbr.rel (%p203) target = $region24
        $region23: #{tpu_custom_call.1} parent=11 // pred_region
          %s207 = ssub.s32 16, 16
          %208 = vsyncadd [#allocation5], %s207
          %211 = dma.hbm_to_smem %s3, 16, [#allocation8], [#allocation5]
        $region24: #{tpu_custom_call.1} parent=11 // pred_fallthru
          _
        // Predicated region
        $region25: #{tpu_custom_call.1} parent=11 // pred_check
          %p212 = pneg %p144
        $region26: #{tpu_custom_call.1} parent=11 // pred_check_branch
          %214 = sbr.rel (%p212) target = $region28
        $region27: #{tpu_custom_call.1} parent=11 // pred_region
          %s216 = ssub.s32 16, 16
          %217 = vsyncadd [#allocation10], %s216
          %220 = dma.hbm_to_smem %s4, 16, [#allocation9], [#allocation10]
        $region28: #{tpu_custom_call.1} parent=11 // pred_fallthru
          _
      $region12: #{tpu_custom_call.1} parent=5 // pred_fallthru
        _
      %p221 = scmp.lt.s32.totalorder %s20, 6
      // Predicated region
      $region29: #{tpu_custom_call.1} parent=5 // pred_check
        %p222 = pneg %p221
      $region30: #{tpu_custom_call.1} parent=5 // pred_check_branch
        %224 = sbr.rel (%p222) target = $region32
      $region31: #{tpu_custom_call.1} parent=5 // pred_region
        // Predicated region
        $region33: #{tpu_custom_call.1} parent=31 // pred_check
          %p225 = pneg %p54
        $region34: #{tpu_custom_call.1} parent=31 // pred_check_branch
          %227 = sbr.rel (%p225) target = $region36
        $region35: #{tpu_custom_call.1} parent=31 // pred_region
          %s228 = sand.u32 %s44, 1
          %s229 = scalar_lea.sflag [#allocation3], %s228
          %s230 = sand.u32 %s44, 1
          %s231 = smul.addr %s230, 16
          %s232 = scalar_lea.vmem [#allocation2], %s231
          %s234 = ssub.s32 256, 256
          %235 = vsyncadd %s229, %s234
          %s236 = smul.addr %s28, 2
          %s237 = smul.addr %s27, 6
          %s238 = sadd.s32 %s236, %s237
          %s239 = smul.addr %s238, 128
          %s240 = scalar_lea.hbm %s0, %s239
          %s241 = sshll.u32 %s232, 4
          %s242 = int_to_ptr.vmem [resolvable:$true] %s241
          %247 = dma.hbm_to_vmem [thread:$0]  %s240, 256, %s242, %s229, 128, 128, 8
        $region36: #{tpu_custom_call.1} parent=31 // pred_fallthru
          _
      $region32: #{tpu_custom_call.1} parent=5 // pred_fallthru
        _
      %p248 = scmp.le.s32.totalorder 1, %s20
      %p249 = scmp.lt.s32.totalorder %s20, 7
      %p250 = pnand %p248, %p249
      %p251 = pneg %p250
      // Predicated region
      $region37: #{tpu_custom_call.1} parent=5 // pred_check
        _
      $region38: #{tpu_custom_call.1} parent=5 // pred_check_branch
        %253 = sbr.rel (%p250) target = $region40
      $region39: #{tpu_custom_call.1} parent=5 // pred_region
        %s254 = ssub.s32 %s20, 1
        %s255 = sand.u32 %s47, 1
        %s256 = scalar_lea.sflag [#allocation3], %s255
        %s257 = sand.u32 %s47, 1
        %s258 = smul.addr %s257, 16
        %s259 = scalar_lea.vmem [#allocation2], %s258
        // Predicated region
        $region41: #{tpu_custom_call.1} parent=39 // pred_check
          %p260 = pneg %p60
        $region42: #{tpu_custom_call.1} parent=39 // pred_check_branch
          %262 = sbr.rel (%p260) target = $region44
        $region43: #{tpu_custom_call.1} parent=39 // pred_region
          %263 = dma.done %s256, 256
        $region44: #{tpu_custom_call.1} parent=39 // pred_fallthru
          _
        // Predicated region
        $region45: #{tpu_custom_call.1} parent=39 // pred_check
          %p264 = pneg %p102
        $region46: #{tpu_custom_call.1} parent=39 // pred_check_branch
          %266 = sbr.rel (%p264) target = $region48
        $region47: #{tpu_custom_call.1} parent=39 // pred_region
          %267 = dma.done [#allocation7], 384
        $region48: #{tpu_custom_call.1} parent=39 // pred_fallthru
          _
        // Predicated region
        $region49: #{tpu_custom_call.1} parent=39 // pred_check
          %p268 = pneg %p123
        $region50: #{tpu_custom_call.1} parent=39 // pred_check_branch
          %270 = sbr.rel (%p268) target = $region52
        $region51: #{tpu_custom_call.1} parent=39 // pred_region
          %271 = dma.done [#allocation5], 16
        $region52: #{tpu_custom_call.1} parent=39 // pred_fallthru
          _
        // Predicated region
        $region53: #{tpu_custom_call.1} parent=39 // pred_check
          %p272 = pneg %p144
        $region54: #{tpu_custom_call.1} parent=39 // pred_check_branch
          %274 = sbr.rel (%p272) target = $region56
        $region55: #{tpu_custom_call.1} parent=39 // pred_region
          %275 = dma.done [#allocation10], 16
        $region56: #{tpu_custom_call.1} parent=39 // pred_fallthru
          _
        %276 = sfence
        %s277 = sand.u32 %s47, 1
        %s278 = scalar_lea.sflag [#allocation3], %s277
        %s279 = sand.u32 %s47, 1
        %s280 = smul.addr %s279, 16
        %s281 = scalar_lea.vmem [#allocation2], %s280
        %p282 = pneg %p60
        %p283 = pneg %p57
        %p284 = pneg %p81
        %p285 = pneg %p78
        %p286 = pneg %p102
        %p287 = pneg %p99
        %p288 = pneg %p123
        %p289 = pneg %p120
        %p290 = pneg %p144
        %p291 = pneg %p141
        %p292 = pneg %p172
        %p293 = pneg %p169
        %s294 = sand.u32 %s159, 1
        %s295 = scalar_lea.sflag [#allocation4], %s294
        %s296 = sand.u32 %s159, 1
        %s297 = smul.addr %s296, 960
        %s298 = scalar_lea.vmem [#allocation11], %s297
        %v300 = vld [vmem:[%s259] sm:$0xff]
        %v301 = vld [vmem:[%s259 + $0x8] sm:$0xff]
        %v302 = vpack.c.bf16 %v301, %v300
        %v303 = vld [vmem:[%s1] sm:$0xf]
        %v304 = vld [vmem:[%s1 + $0x4] sm:$0xf]
        %v305 = vld [vmem:[%s1 + $0x8] sm:$0xf]
        %v306 = vld [vmem:[%s1 + $0xc] sm:$0xf]
        %v307 = vld [vmem:[%s1 + $0x10] sm:$0xf]
        %v308 = vld [vmem:[%s1 + $0x14] sm:$0xf]
        %v309 = vld [vmem:[%s1 + $0x18] sm:$0xf]
        %v310 = vld [vmem:[%s1 + $0x1c] sm:$0xf]
        %v311 = vld [vmem:[%s1 + $0x20] sm:$0xf]
        %v312 = vld [vmem:[%s1 + $0x24] sm:$0xf]
        %v313 = vld [vmem:[%s1 + $0x28] sm:$0xf]
        %v314 = vld [vmem:[%s1 + $0x2c] sm:$0xf]
        %v315 = vld [vmem:[%s1 + $0x30] sm:$0xf]
        %v316 = vld [vmem:[%s1 + $0x34] sm:$0xf]
        %v317 = vld [vmem:[%s1 + $0x38] sm:$0xf]
        %v318 = vld [vmem:[%s1 + $0x3c] sm:$0xf]
        %v319 = vld [vmem:[%s1 + $0x40] sm:$0xf]
        %v320 = vld [vmem:[%s1 + $0x44] sm:$0xf]
        %v321 = vld [vmem:[%s1 + $0x48] sm:$0xf]
        %v322 = vld [vmem:[%s1 + $0x4c] sm:$0xf]
        %v323 = vld [vmem:[%s1 + $0x50] sm:$0xf]
        %v324 = vld [vmem:[%s1 + $0x54] sm:$0xf]
        %v325 = vld [vmem:[%s1 + $0x58] sm:$0xf]
        %v326 = vld [vmem:[%s1 + $0x5c] sm:$0xf]
        %v327 = vld [vmem:[%s1 + $0x60] sm:$0xf]
        %v328 = vld [vmem:[%s1 + $0x64] sm:$0xf]
        %v329 = vld [vmem:[%s1 + $0x68] sm:$0xf]
        %v330 = vld [vmem:[%s1 + $0x6c] sm:$0xf]
        %v331 = vld [vmem:[%s1 + $0x70] sm:$0xf]
        %v332 = vld [vmem:[%s1 + $0x74] sm:$0xf]
        %v333 = vld [vmem:[%s1 + $0x78] sm:$0xf]
        %v334 = vld [vmem:[%s1 + $0x7c] sm:$0xf]
        %v335 = vld [vmem:[%s1 + $0x80] sm:$0xf]
        %v336 = vld [vmem:[%s1 + $0x84] sm:$0xf]
        %v337 = vld [vmem:[%s1 + $0x88] sm:$0xf]
        %v338 = vld [vmem:[%s1 + $0x8c] sm:$0xf]
        %v339 = vld [vmem:[%s1 + $0x90] sm:$0xf]
        %v340 = vld [vmem:[%s1 + $0x94] sm:$0xf]
        %v341 = vld [vmem:[%s1 + $0x98] sm:$0xf]
        %v342 = vld [vmem:[%s1 + $0x9c] sm:$0xf]
        %v383 = vunpack.c.l.b16 %v303
        %v384 = vunpack.c.l.b16 %v304
        %v385 = vunpack.c.l.b16 %v305
        %v386 = vunpack.c.l.b16 %v306
        %v387 = vunpack.c.l.b16 %v307
        %v388 = vunpack.c.l.b16 %v308
        %v389 = vunpack.c.l.b16 %v309
        %v390 = vunpack.c.l.b16 %v310
        %v391 = vunpack.c.l.b16 %v311
        %v392 = vunpack.c.l.b16 %v312
        %v393 = vunpack.c.l.b16 %v313
        %v394 = vunpack.c.l.b16 %v314
        %v395 = vunpack.c.l.b16 %v315
        %v396 = vunpack.c.l.b16 %v316
        %v397 = vunpack.c.l.b16 %v317
        %v398 = vunpack.c.l.b16 %v318
        %v399 = vunpack.c.l.b16 %v319
        %v400 = vunpack.c.l.b16 %v320
        %v401 = vunpack.c.l.b16 %v321
        %v402 = vunpack.c.l.b16 %v322
        %v403 = vunpack.c.l.b16 %v323
        %v404 = vunpack.c.l.b16 %v324
        %v405 = vunpack.c.l.b16 %v325
        %v406 = vunpack.c.l.b16 %v326
        %v407 = vunpack.c.l.b16 %v327
        %v408 = vunpack.c.l.b16 %v328
        %v409 = vunpack.c.l.b16 %v329
        %v410 = vunpack.c.l.b16 %v330
        %v411 = vunpack.c.l.b16 %v331
        %v412 = vunpack.c.l.b16 %v332
        %v413 = vunpack.c.l.b16 %v333
        %v414 = vunpack.c.l.b16 %v334
        %v415 = vunpack.c.l.b16 %v335
        %v416 = vunpack.c.l.b16 %v336
        %v417 = vunpack.c.l.b16 %v337
        %v418 = vunpack.c.l.b16 %v338
        %v419 = vunpack.c.l.b16 %v339
        %v420 = vunpack.c.l.b16 %v340
        %v421 = vunpack.c.l.b16 %v341
        %v422 = vunpack.c.l.b16 %v342
        %v423 = vpack.c.b16 %v384, %v383
        %v424 = vpack.c.b16 %v386, %v385
        %v425 = vpack.c.b16 %v388, %v387
        %v426 = vpack.c.b16 %v390, %v389
        %v427 = vpack.c.b16 %v392, %v391
        %v428 = vpack.c.b16 %v394, %v393
        %v429 = vpack.c.b16 %v396, %v395
        %v430 = vpack.c.b16 %v398, %v397
        %v431 = vpack.c.b16 %v400, %v399
        %v432 = vpack.c.b16 %v402, %v401
        %v433 = vpack.c.b16 %v404, %v403
        %v434 = vpack.c.b16 %v406, %v405
        %v435 = vpack.c.b16 %v408, %v407
        %v436 = vpack.c.b16 %v410, %v409
        %v437 = vpack.c.b16 %v412, %v411
        %v438 = vpack.c.b16 %v414, %v413
        %v439 = vpack.c.b16 %v416, %v415
        %v440 = vpack.c.b16 %v418, %v417
        %v441 = vpack.c.b16 %v420, %v419
        %v442 = vpack.c.b16 %v422, %v421
        %vm443 = vcmask 130048
        %v445 = vsel %vm443, %v423, 0
        %v448 = vsel %vm443, %v424, 0
        %v451 = vsel %vm443, %v425, 0
        %v454 = vsel %vm443, %v426, 0
        %v457 = vsel %vm443, %v427, 0
        %v460 = vsel %vm443, %v428, 0
        %v463 = vsel %vm443, %v429, 0
        %v466 = vsel %vm443, %v430, 0
        %v469 = vsel %vm443, %v431, 0
        %v472 = vsel %vm443, %v432, 0
        %v475 = vsel %vm443, %v433, 0
        %v478 = vsel %vm443, %v434, 0
        %v481 = vsel %vm443, %v435, 0
        %v484 = vsel %vm443, %v436, 0
        %v487 = vsel %vm443, %v437, 0
        %v490 = vsel %vm443, %v438, 0
        %v493 = vsel %vm443, %v439, 0
        %v496 = vsel %vm443, %v440, 0
        %v499 = vsel %vm443, %v441, 0
        %v502 = vsel %vm443, %v442, 0
        %504 = vmatprep.subr.bf16.mxu0 0
        %505 = vmatpush1.bf16.msra.mxu0 %v302
        %506 = vmatprep.subr.bf16.mxu0 0
        %507 = vmatpush1.bf16.msra.mxu0 0
        %508 = vmatprep.subr.bf16.mxu0 0
        %509 = vmatpush1.bf16.msra.mxu0 0
        %510 = vmatprep.subr.bf16.mxu0 0
        %511 = vmatpush1.bf16.msra.mxu0 0
        %512 = vmatprep.subr.bf16.mxu0 0
        %513 = vmatpush1.bf16.msra.mxu0 0
        %514 = vmatprep.subr.bf16.mxu0 0
        %515 = vmatpush1.bf16.msra.mxu0 0
        %516 = vmatprep.subr.bf16.mxu0 0
        %517 = vmatpush1.bf16.msra.mxu0 0
        %518 = vmatprep.subr.bf16.mxu0 0
        %519 = vmatpush1.bf16.msra.mxu0 0
        %520 = vmatprep.subr.bf16.mxu0 0
        %521 = vmatpush1.bf16.msra.mxu0 0
        %522 = vmatprep.subr.bf16.mxu0 0
        %523 = vmatpush1.bf16.msra.mxu0 0
        %524 = vmatprep.subr.bf16.mxu0 0
        %525 = vmatpush1.bf16.msra.mxu0 0
        %526 = vmatprep.subr.bf16.mxu0 0
        %527 = vmatpush1.bf16.msra.mxu0 0
        %528 = vmatprep.subr.bf16.mxu0 0
        %529 = vmatpush1.bf16.msra.mxu0 0
        %530 = vmatprep.subr.bf16.mxu0 0
        %531 = vmatpush1.bf16.msra.mxu0 0
        %532 = vmatprep.subr.bf16.mxu0 0
        %533 = vmatpush1.bf16.msra.mxu0 0
        %534 = vmatprep.subr.bf16.mxu0 0
        %535 = vmatpush1.bf16.msra.mxu0 0
        %536 = vmatprep.mubr.bf16.mxu0 0
        %537 = vmatmul.mubr.bf16.gmra.mrb[0].mxu0 %v445
        %v538 = vpop.f32.mrb[0].mxu0
        %v539 = vadd.f32 0.0, %v538
        %v540 = vpop.f32.mrb[0].mxu0
        %v541 = vpop.f32.mrb[0].mxu0
        %v542 = vadd.f32 0.0, %v541
        %v543 = vpop.f32.mrb[0].mxu0
        %544 = vmatprep.mubr.bf16.mxu0 0
        %545 = vmatmul.mubr.bf16.gmra.mrb[0].mxu0 %v448
        %v546 = vpop.f32.mrb[0].mxu0
        %v547 = vadd.f32 0.0, %v546
        %v548 = vpop.f32.mrb[0].mxu0
        %v549 = vpop.f32.mrb[0].mxu0
        %v550 = vadd.f32 0.0, %v549
        %v551 = vpop.f32.mrb[0].mxu0
        %552 = vmatprep.mubr.bf16.mxu0 0
        %553 = vmatmul.mubr.bf16.gmra.mrb[0].mxu0 %v451
        %v554 = vpop.f32.mrb[0].mxu0
        %v555 = vadd.f32 0.0, %v554
        %v556 = vpop.f32.mrb[0].mxu0
        %v557 = vpop.f32.mrb[0].mxu0
        %v558 = vadd.f32 0.0, %v557
        %v559 = vpop.f32.mrb[0].mxu0
        %560 = vmatprep.mubr.bf16.mxu0 0
        %561 = vmatmul.mubr.bf16.gmra.mrb[0].mxu0 %v454
        %v562 = vpop.f32.mrb[0].mxu0
        %v563 = vadd.f32 0.0, %v562
        %v564 = vpop.f32.mrb[0].mxu0
        %v565 = vpop.f32.mrb[0].mxu0
        %v566 = vadd.f32 0.0, %v565
        %v567 = vpop.f32.mrb[0].mxu0
        %568 = vmatprep.mubr.bf16.mxu0 0
        %569 = vmatmul.mubr.bf16.gmra.mrb[0].mxu0 %v457
        %v570 = vpop.f32.mrb[0].mxu0
        %v571 = vadd.f32 0.0, %v570
        %v572 = vpop.f32.mrb[0].mxu0
        %v573 = vpop.f32.mrb[0].mxu0
        %v574 = vadd.f32 0.0, %v573
        %v575 = vpop.f32.mrb[0].mxu0
        %576 = vmatprep.mubr.bf16.mxu0 0
        %577 = vmatmul.mubr.bf16.gmra.mrb[0].mxu0 %v460
        %v578 = vpop.f32.mrb[0].mxu0
        %v579 = vadd.f32 0.0, %v578
        %v580 = vpop.f32.mrb[0].mxu0
        %v581 = vpop.f32.mrb[0].mxu0
        %v582 = vadd.f32 0.0, %v581
        %v583 = vpop.f32.mrb[0].mxu0
        %584 = vmatprep.mubr.bf16.mxu0 0
        %585 = vmatmul.mubr.bf16.gmra.mrb[0].mxu0 %v463
        %v586 = vpop.f32.mrb[0].mxu0
        %v587 = vadd.f32 0.0, %v586
        %v588 = vpop.f32.mrb[0].mxu0
        %v589 = vpop.f32.mrb[0].mxu0
        %v590 = vadd.f32 0.0, %v589
        %v591 = vpop.f32.mrb[0].mxu0
        %592 = vmatprep.mubr.bf16.mxu0 0
        %593 = vmatmul.mubr.bf16.gmra.mrb[0].mxu0 %v466
        %v594 = vpop.f32.mrb[0].mxu0
        %v595 = vadd.f32 0.0, %v594
        %v596 = vpop.f32.mrb[0].mxu0
        %v597 = vpop.f32.mrb[0].mxu0
        %v598 = vadd.f32 0.0, %v597
        %v599 = vpop.f32.mrb[0].mxu0
        %600 = vmatprep.mubr.bf16.mxu0 0
        %601 = vmatmul.mubr.bf16.gmra.mrb[0].mxu0 %v469
        %v602 = vpop.f32.mrb[0].mxu0
        %v603 = vadd.f32 0.0, %v602
        %v604 = vpop.f32.mrb[0].mxu0
        %v605 = vpop.f32.mrb[0].mxu0
        %v606 = vadd.f32 0.0, %v605
        %v607 = vpop.f32.mrb[0].mxu0
        %608 = vmatprep.mubr.bf16.mxu0 0
        %609 = vmatmul.mubr.bf16.gmra.mrb[0].mxu0 %v472
        %v610 = vpop.f32.mrb[0].mxu0
        %v611 = vadd.f32 0.0, %v610
        %v612 = vpop.f32.mrb[0].mxu0
        %v613 = vpop.f32.mrb[0].mxu0
        %v614 = vadd.f32 0.0, %v613
        %v615 = vpop.f32.mrb[0].mxu0
        %616 = vmatprep.mubr.bf16.mxu0 0
        %617 = vmatmul.mubr.bf16.gmra.mrb[0].mxu0 %v475
        %v618 = vpop.f32.mrb[0].mxu0
        %v619 = vadd.f32 0.0, %v618
        %v620 = vpop.f32.mrb[0].mxu0
        %v621 = vpop.f32.mrb[0].mxu0
        %v622 = vadd.f32 0.0, %v621
        %v623 = vpop.f32.mrb[0].mxu0
        %624 = vmatprep.mubr.bf16.mxu0 0
        %625 = vmatmul.mubr.bf16.gmra.mrb[0].mxu0 %v478
        %v626 = vpop.f32.mrb[0].mxu0
        %v627 = vadd.f32 0.0, %v626
        %v628 = vpop.f32.mrb[0].mxu0
        %v629 = vpop.f32.mrb[0].mxu0
        %v630 = vadd.f32 0.0, %v629
        %v631 = vpop.f32.mrb[0].mxu0
        %632 = vmatprep.mubr.bf16.mxu0 0
        %633 = vmatmul.mubr.bf16.gmra.mrb[0].mxu0 %v481
        %v634 = vpop.f32.mrb[0].mxu0
        %v635 = vadd.f32 0.0, %v634
        %v636 = vpop.f32.mrb[0].mxu0
        %v637 = vpop.f32.mrb[0].mxu0
        %v638 = vadd.f32 0.0, %v637
        %v639 = vpop.f32.mrb[0].mxu0
        %640 = vmatprep.mubr.bf16.mxu0 0
        %641 = vmatmul.mubr.bf16.gmra.mrb[0].mxu0 %v484
        %v642 = vpop.f32.mrb[0].mxu0
        %v643 = vadd.f32 0.0, %v642
        %v644 = vpop.f32.mrb[0].mxu0
        %v645 = vpop.f32.mrb[0].mxu0
        %v646 = vadd.f32 0.0, %v645
        %v647 = vpop.f32.mrb[0].mxu0
        %648 = vmatprep.mubr.bf16.mxu0 0
        %649 = vmatmul.mubr.bf16.gmra.mrb[0].mxu0 %v487
        %v650 = vpop.f32.mrb[0].mxu0
        %v651 = vadd.f32 0.0, %v650
        %v652 = vpop.f32.mrb[0].mxu0
        %v653 = vpop.f32.mrb[0].mxu0
        %v654 = vadd.f32 0.0, %v653
        %v655 = vpop.f32.mrb[0].mxu0
        %656 = vmatprep.mubr.bf16.mxu0 0
        %657 = vmatmul.mubr.bf16.gmra.mrb[0].mxu0 %v490
        %v658 = vpop.f32.mrb[0].mxu0
        %v659 = vadd.f32 0.0, %v658
        %v660 = vpop.f32.mrb[0].mxu0
        %v661 = vpop.f32.mrb[0].mxu0
        %v662 = vadd.f32 0.0, %v661
        %v663 = vpop.f32.mrb[0].mxu0
        %664 = vmatprep.mubr.bf16.mxu0 0
        %665 = vmatmul.mubr.bf16.gmra.mrb[0].mxu0 %v493
        %v666 = vpop.f32.mrb[0].mxu0
        %v667 = vadd.f32 0.0, %v666
        %v668 = vpop.f32.mrb[0].mxu0
        %v669 = vpop.f32.mrb[0].mxu0
        %v670 = vadd.f32 0.0, %v669
        %v671 = vpop.f32.mrb[0].mxu0
        %672 = vmatprep.mubr.bf16.mxu0 0
        %673 = vmatmul.mubr.bf16.gmra.mrb[0].mxu0 %v496
        %v674 = vpop.f32.mrb[0].mxu0
        %v675 = vadd.f32 0.0, %v674
        %v676 = vpop.f32.mrb[0].mxu0
        %v677 = vpop.f32.mrb[0].mxu0
        %v678 = vadd.f32 0.0, %v677
        %v679 = vpop.f32.mrb[0].mxu0
        %680 = vmatprep.mubr.bf16.mxu0 0
        %681 = vmatmul.mubr.bf16.gmra.mrb[0].mxu0 %v499
        %v682 = vpop.f32.mrb[0].mxu0
        %v683 = vadd.f32 0.0, %v682
        %v684 = vpop.f32.mrb[0].mxu0
        %v685 = vpop.f32.mrb[0].mxu0
        %v686 = vadd.f32 0.0, %v685
        %v687 = vpop.f32.mrb[0].mxu0
        %688 = vmatprep.mubr.bf16.mxu0 0
        %689 = vmatmul.mubr.bf16.gmra.mrb[0].mxu0 %v502
        %v690 = vpop.f32.mrb[0].mxu0
        %v691 = vadd.f32 0.0, %v690
        %v692 = vpop.f32.mrb[0].mxu0
        %v693 = vpop.f32.mrb[0].mxu0
        %v694 = vadd.f32 0.0, %v693
        %v695 = vpop.f32.mrb[0].mxu0
        %696 = vdwg.mxu0
        %v697 = vpack.c.bf16 %v542, %v539
        %v698 = vpack.c.bf16 %v550, %v547
        %v699 = vpack.c.bf16 %v558, %v555
        %v700 = vpack.c.bf16 %v566, %v563
        %v701 = vpack.c.bf16 %v574, %v571
        %v702 = vpack.c.bf16 %v582, %v579
        %v703 = vpack.c.bf16 %v590, %v587
        %v704 = vpack.c.bf16 %v598, %v595
        %v705 = vpack.c.bf16 %v606, %v603
        %v706 = vpack.c.bf16 %v614, %v611
        %v707 = vpack.c.bf16 %v622, %v619
        %v708 = vpack.c.bf16 %v630, %v627
        %v709 = vpack.c.bf16 %v638, %v635
        %v710 = vpack.c.bf16 %v646, %v643
        %v711 = vpack.c.bf16 %v654, %v651
        %v712 = vpack.c.bf16 %v662, %v659
        %v713 = vpack.c.bf16 %v670, %v667
        %v714 = vpack.c.bf16 %v678, %v675
        %v715 = vpack.c.bf16 %v686, %v683
        %v716 = vpack.c.bf16 %v694, %v691
        %v717 = vld [vmem:[#allocation6] sm:$0xff]
        %v718 = vld [vmem:[#allocation6 + $0x8] sm:$0xf]
        %v719 = vld [vmem:[#allocation6 + $0xc] sm:$0xff]
        %v720 = vld [vmem:[#allocation6 + $0x14] sm:$0xf]
        %v725 = vunpack.c.l.b16 %v717
        %v726 = vunpack.c.h.b16 %v717
        %v727 = vunpack.c.l.b16 %v718
        %v728 = vunpack.c.l.b16 %v719
        %v729 = vunpack.c.h.b16 %v719
        %v730 = vunpack.c.l.b16 %v720
        %v731 = vpack.c.b16 %v728, %v725
        %v732 = vpack.c.b16 %v729, %v726
        %v733 = vpack.c.b16 %v730, %v727
        %v738 = vsel %vm443, %v697, 0
        %v741 = vsel %vm443, %v698, 0
        %v744 = vsel %vm443, %v699, 0
        %v747 = vsel %vm443, %v700, 0
        %v750 = vsel %vm443, %v701, 0
        %v753 = vsel %vm443, %v702, 0
        %v756 = vsel %vm443, %v703, 0
        %v759 = vsel %vm443, %v704, 0
        %v762 = vsel %vm443, %v705, 0
        %v765 = vsel %vm443, %v706, 0
        %v768 = vsel %vm443, %v707, 0
        %v771 = vsel %vm443, %v708, 0
        %v774 = vsel %vm443, %v709, 0
        %v777 = vsel %vm443, %v710, 0
        %v780 = vsel %vm443, %v711, 0
        %v783 = vsel %vm443, %v712, 0
        %v786 = vsel %vm443, %v713, 0
        %v789 = vsel %vm443, %v714, 0
        %v792 = vsel %vm443, %v715, 0
        %v795 = vsel %vm443, %v716, 0
        %797 = vmatprep.subr.bf16.mxu0 %v732
        %798 = vmatpush1.bf16.msra.mxu0 %v731
        %799 = vmatprep.subr.bf16.mxu0 0
        %800 = vmatpush1.bf16.msra.mxu0 0
        %801 = vmatprep.subr.bf16.mxu0 0
        %802 = vmatpush1.bf16.msra.mxu0 0
        %803 = vmatprep.subr.bf16.mxu0 0
        %804 = vmatpush1.bf16.msra.mxu0 0
        %805 = vmatprep.subr.bf16.mxu0 0
        %806 = vmatpush1.bf16.msra.mxu0 0
        %807 = vmatprep.subr.bf16.mxu0 0
        %808 = vmatpush1.bf16.msra.mxu0 0
        %809 = vmatprep.subr.bf16.mxu0 0
        %810 = vmatpush1.bf16.msra.mxu0 0
        %811 = vmatprep.subr.bf16.mxu0 0
        %812 = vmatpush1.bf16.msra.mxu0 0
        %813 = vmatprep.subr.bf16.mxu0 0
        %814 = vmatpush1.bf16.msra.mxu0 0
        %815 = vmatprep.subr.bf16.mxu0 0
        %816 = vmatpush1.bf16.msra.mxu0 0
        %817 = vmatprep.subr.bf16.mxu0 0
        %818 = vmatpush1.bf16.msra.mxu0 0
        %819 = vmatprep.subr.bf16.mxu0 0
        %820 = vmatpush1.bf16.msra.mxu0 0
        %821 = vmatprep.subr.bf16.mxu0 0
        %822 = vmatpush1.bf16.msra.mxu0 0
        %823 = vmatprep.subr.bf16.mxu0 0
        %824 = vmatpush1.bf16.msra.mxu0 0
        %825 = vmatprep.subr.bf16.mxu0 0
        %826 = vmatpush1.bf16.msra.mxu0 0
        %827 = vmatprep.subr.bf16.mxu0 0
        %828 = vmatpush1.bf16.msra.mxu0 0
        %829 = vmatprep.mubr.bf16.mxu0 0
        %830 = vmatmul.mubr.bf16.gmra.mrb[0].mxu0 %v738
        %v831 = vpop.f32.mrb[0].mxu0
        %v832 = vadd.f32 0.0, %v831
        %v833 = vpop.f32.mrb[0].mxu0
        %v834 = vadd.f32 0.0, %v833
        %v835 = vpop.f32.mrb[0].mxu0
        %v836 = vadd.f32 0.0, %v835
        %v837 = vpop.f32.mrb[0].mxu0
        %v838 = vadd.f32 0.0, %v837
        %839 = vmatprep.mubr.bf16.mxu0 0
        %840 = vmatmul.mubr.bf16.gmra.mrb[0].mxu0 %v741
        %v841 = vpop.f32.mrb[0].mxu0
        %v842 = vadd.f32 0.0, %v841
        %v843 = vpop.f32.mrb[0].mxu0
        %v844 = vadd.f32 0.0, %v843
        %v845 = vpop.f32.mrb[0].mxu0
        %v846 = vadd.f32 0.0, %v845
        %v847 = vpop.f32.mrb[0].mxu0
        %v848 = vadd.f32 0.0, %v847
        %849 = vmatprep.mubr.bf16.mxu0 0
        %850 = vmatmul.mubr.bf16.gmra.mrb[0].mxu0 %v744
        %v851 = vpop.f32.mrb[0].mxu0
        %v852 = vadd.f32 0.0, %v851
        %v853 = vpop.f32.mrb[0].mxu0
        %v854 = vadd.f32 0.0, %v853
        %v855 = vpop.f32.mrb[0].mxu0
        %v856 = vadd.f32 0.0, %v855
        %v857 = vpop.f32.mrb[0].mxu0
        %v858 = vadd.f32 0.0, %v857
        %859 = vmatprep.mubr.bf16.mxu0 0
        %860 = vmatmul.mubr.bf16.gmra.mrb[0].mxu0 %v747
        %v861 = vpop.f32.mrb[0].mxu0
        %v862 = vadd.f32 0.0, %v861
        %v863 = vpop.f32.mrb[0].mxu0
        %v864 = vadd.f32 0.0, %v863
        %v865 = vpop.f32.mrb[0].mxu0
        %v866 = vadd.f32 0.0, %v865
        %v867 = vpop.f32.mrb[0].mxu0
        %v868 = vadd.f32 0.0, %v867
        %869 = vmatprep.mubr.bf16.mxu0 0
        %870 = vmatmul.mubr.bf16.gmra.mrb[0].mxu0 %v750
        %v871 = vpop.f32.mrb[0].mxu0
        %v872 = vadd.f32 0.0, %v871
        %v873 = vpop.f32.mrb[0].mxu0
        %v874 = vadd.f32 0.0, %v873
        %v875 = vpop.f32.mrb[0].mxu0
        %v876 = vadd.f32 0.0, %v875
        %v877 = vpop.f32.mrb[0].mxu0
        %v878 = vadd.f32 0.0, %v877
        %879 = vmatprep.mubr.bf16.mxu0 0
        %880 = vmatmul.mubr.bf16.gmra.mrb[0].mxu0 %v753
        %v881 = vpop.f32.mrb[0].mxu0
        %v882 = vadd.f32 0.0, %v881
        %v883 = vpop.f32.mrb[0].mxu0
        %v884 = vadd.f32 0.0, %v883
        %v885 = vpop.f32.mrb[0].mxu0
        %v886 = vadd.f32 0.0, %v885
        %v887 = vpop.f32.mrb[0].mxu0
        %v888 = vadd.f32 0.0, %v887
        %889 = vmatprep.mubr.bf16.mxu0 0
        %890 = vmatmul.mubr.bf16.gmra.mrb[0].mxu0 %v756
        %v891 = vpop.f32.mrb[0].mxu0
        %v892 = vadd.f32 0.0, %v891
        %v893 = vpop.f32.mrb[0].mxu0
        %v894 = vadd.f32 0.0, %v893
        %v895 = vpop.f32.mrb[0].mxu0
        %v896 = vadd.f32 0.0, %v895
        %v897 = vpop.f32.mrb[0].mxu0
        %v898 = vadd.f32 0.0, %v897
        %899 = vmatprep.mubr.bf16.mxu0 0
        %900 = vmatmul.mubr.bf16.gmra.mrb[0].mxu0 %v759
        %v901 = vpop.f32.mrb[0].mxu0
        %v902 = vadd.f32 0.0, %v901
        %v903 = vpop.f32.mrb[0].mxu0
        %v904 = vadd.f32 0.0, %v903
        %v905 = vpop.f32.mrb[0].mxu0
        %v906 = vadd.f32 0.0, %v905
        %v907 = vpop.f32.mrb[0].mxu0
        %v908 = vadd.f32 0.0, %v907
        %909 = vmatprep.mubr.bf16.mxu0 0
        %910 = vmatmul.mubr.bf16.gmra.mrb[0].mxu0 %v762
        %v911 = vpop.f32.mrb[0].mxu0
        %v912 = vadd.f32 0.0, %v911
        %v913 = vpop.f32.mrb[0].mxu0
        %v914 = vadd.f32 0.0, %v913
        %v915 = vpop.f32.mrb[0].mxu0
        %v916 = vadd.f32 0.0, %v915
        %v917 = vpop.f32.mrb[0].mxu0
        %v918 = vadd.f32 0.0, %v917
        %919 = vmatprep.mubr.bf16.mxu0 0
        %920 = vmatmul.mubr.bf16.gmra.mrb[0].mxu0 %v765
        %v921 = vpop.f32.mrb[0].mxu0
        %v922 = vadd.f32 0.0, %v921
        %v923 = vpop.f32.mrb[0].mxu0
        %v924 = vadd.f32 0.0, %v923
        %v925 = vpop.f32.mrb[0].mxu0
        %v926 = vadd.f32 0.0, %v925
        %v927 = vpop.f32.mrb[0].mxu0
        %v928 = vadd.f32 0.0, %v927
        %929 = vmatprep.mubr.bf16.mxu0 0
        %930 = vmatmul.mubr.bf16.gmra.mrb[0].mxu0 %v768
        %v931 = vpop.f32.mrb[0].mxu0
        %v932 = vadd.f32 0.0, %v931
        %v933 = vpop.f32.mrb[0].mxu0
        %v934 = vadd.f32 0.0, %v933
        %v935 = vpop.f32.mrb[0].mxu0
        %v936 = vadd.f32 0.0, %v935
        %v937 = vpop.f32.mrb[0].mxu0
        %v938 = vadd.f32 0.0, %v937
        %939 = vmatprep.mubr.bf16.mxu0 0
        %940 = vmatmul.mubr.bf16.gmra.mrb[0].mxu0 %v771
        %v941 = vpop.f32.mrb[0].mxu0
        %v942 = vadd.f32 0.0, %v941
        %v943 = vpop.f32.mrb[0].mxu0
        %v944 = vadd.f32 0.0, %v943
        %v945 = vpop.f32.mrb[0].mxu0
        %v946 = vadd.f32 0.0, %v945
        %v947 = vpop.f32.mrb[0].mxu0
        %v948 = vadd.f32 0.0, %v947
        %949 = vmatprep.mubr.bf16.mxu0 0
        %950 = vmatmul.mubr.bf16.gmra.mrb[0].mxu0 %v774
        %v951 = vpop.f32.mrb[0].mxu0
        %v952 = vadd.f32 0.0, %v951
        %v953 = vpop.f32.mrb[0].mxu0
        %v954 = vadd.f32 0.0, %v953
        %v955 = vpop.f32.mrb[0].mxu0
        %v956 = vadd.f32 0.0, %v955
        %v957 = vpop.f32.mrb[0].mxu0
        %v958 = vadd.f32 0.0, %v957
        %959 = vmatprep.mubr.bf16.mxu0 0
        %960 = vmatmul.mubr.bf16.gmra.mrb[0].mxu0 %v777
        %v961 = vpop.f32.mrb[0].mxu0
        %v962 = vadd.f32 0.0, %v961
        %v963 = vpop.f32.mrb[0].mxu0
        %v964 = vadd.f32 0.0, %v963
        %v965 = vpop.f32.mrb[0].mxu0
        %v966 = vadd.f32 0.0, %v965
        %v967 = vpop.f32.mrb[0].mxu0
        %v968 = vadd.f32 0.0, %v967
        %969 = vmatprep.mubr.bf16.mxu0 0
        %970 = vmatmul.mubr.bf16.gmra.mrb[0].mxu0 %v780
        %v971 = vpop.f32.mrb[0].mxu0
        %v972 = vadd.f32 0.0, %v971
        %v973 = vpop.f32.mrb[0].mxu0
        %v974 = vadd.f32 0.0, %v973
        %v975 = vpop.f32.mrb[0].mxu0
        %v976 = vadd.f32 0.0, %v975
        %v977 = vpop.f32.mrb[0].mxu0
        %v978 = vadd.f32 0.0, %v977
        %979 = vmatprep.mubr.bf16.mxu0 0
        %980 = vmatmul.mubr.bf16.gmra.mrb[0].mxu0 %v783
        %v981 = vpop.f32.mrb[0].mxu0
        %v982 = vadd.f32 0.0, %v981
        %v983 = vpop.f32.mrb[0].mxu0
        %v984 = vadd.f32 0.0, %v983
        %v985 = vpop.f32.mrb[0].mxu0
        %v986 = vadd.f32 0.0, %v985
        %v987 = vpop.f32.mrb[0].mxu0
        %v988 = vadd.f32 0.0, %v987
        %989 = vmatprep.mubr.bf16.mxu0 0
        %990 = vmatmul.mubr.bf16.gmra.mrb[0].mxu0 %v786
        %v991 = vpop.f32.mrb[0].mxu0
        %v992 = vadd.f32 0.0, %v991
        %v993 = vpop.f32.mrb[0].mxu0
        %v994 = vadd.f32 0.0, %v993
        %v995 = vpop.f32.mrb[0].mxu0
        %v996 = vadd.f32 0.0, %v995
        %v997 = vpop.f32.mrb[0].mxu0
        %v998 = vadd.f32 0.0, %v997
        %999 = vmatprep.mubr.bf16.mxu0 0
        %1000 = vmatmul.mubr.bf16.gmra.mrb[0].mxu0 %v789
        %v1001 = vpop.f32.mrb[0].mxu0
        %v1002 = vadd.f32 0.0, %v1001
        %v1003 = vpop.f32.mrb[0].mxu0
        %v1004 = vadd.f32 0.0, %v1003
        %v1005 = vpop.f32.mrb[0].mxu0
        %v1006 = vadd.f32 0.0, %v1005
        %v1007 = vpop.f32.mrb[0].mxu0
        %v1008 = vadd.f32 0.0, %v1007
        %1009 = vmatprep.mubr.bf16.mxu0 0
        %1010 = vmatmul.mubr.bf16.gmra.mrb[0].mxu0 %v792
        %v1011 = vpop.f32.mrb[0].mxu0
        %v1012 = vadd.f32 0.0, %v1011
        %v1013 = vpop.f32.mrb[0].mxu0
        %v1014 = vadd.f32 0.0, %v1013
        %v1015 = vpop.f32.mrb[0].mxu0
        %v1016 = vadd.f32 0.0, %v1015
        %v1017 = vpop.f32.mrb[0].mxu0
        %v1018 = vadd.f32 0.0, %v1017
        %1019 = vmatprep.mubr.bf16.mxu0 0
        %1020 = vmatmul.mubr.bf16.gmra.mrb[0].mxu0 %v795
        %v1021 = vpop.f32.mrb[0].mxu0
        %v1022 = vadd.f32 0.0, %v1021
        %v1023 = vpop.f32.mrb[0].mxu0
        %v1024 = vadd.f32 0.0, %v1023
        %v1025 = vpop.f32.mrb[0].mxu0
        %v1026 = vadd.f32 0.0, %v1025
        %v1027 = vpop.f32.mrb[0].mxu0
        %v1028 = vadd.f32 0.0, %v1027
        %1029 = vdwg.mxu0
        %1030 = vmatprep.subr.bf16.mxu0 0
        %1031 = vmatpush1.bf16.msra.mxu0 %v733
        %1032 = vmatprep.subr.bf16.mxu0 0
        %1033 = vmatpush1.bf16.msra.mxu0 0
        %1034 = vmatprep.subr.bf16.mxu0 0
        %1035 = vmatpush1.bf16.msra.mxu0 0
        %1036 = vmatprep.subr.bf16.mxu0 0
        %1037 = vmatpush1.bf16.msra.mxu0 0
        %1038 = vmatprep.subr.bf16.mxu0 0
        %1039 = vmatpush1.bf16.msra.mxu0 0
        %1040 = vmatprep.subr.bf16.mxu0 0
        %1041 = vmatpush1.bf16.msra.mxu0 0
        %1042 = vmatprep.subr.bf16.mxu0 0
        %1043 = vmatpush1.bf16.msra.mxu0 0
        %1044 = vmatprep.subr.bf16.mxu0 0
        %1045 = vmatpush1.bf16.msra.mxu0 0
        %1046 = vmatprep.subr.bf16.mxu0 0
        %1047 = vmatpush1.bf16.msra.mxu0 0
        %1048 = vmatprep.subr.bf16.mxu0 0
        %1049 = vmatpush1.bf16.msra.mxu0 0
        %1050 = vmatprep.subr.bf16.mxu0 0
        %1051 = vmatpush1.bf16.msra.mxu0 0
        %1052 = vmatprep.subr.bf16.mxu0 0
        %1053 = vmatpush1.bf16.msra.mxu0 0
        %1054 = vmatprep.subr.bf16.mxu0 0
        %1055 = vmatpush1.bf16.msra.mxu0 0
        %1056 = vmatprep.subr.bf16.mxu0 0
        %1057 = vmatpush1.bf16.msra.mxu0 0
        %1058 = vmatprep.subr.bf16.mxu0 0
        %1059 = vmatpush1.bf16.msra.mxu0 0
        %1060 = vmatprep.subr.bf16.mxu0 0
        %1061 = vmatpush1.bf16.msra.mxu0 0
        %1062 = vmatprep.mubr.bf16.mxu0 0
        %1063 = vmatmul.mubr.bf16.gmra.mrb[0].mxu0 %v738
        %v1064 = vpop.f32.mrb[0].mxu0
        %v1065 = vadd.f32 0.0, %v1064
        %v1066 = vpop.f32.mrb[0].mxu0
        %v1067 = vpop.f32.mrb[0].mxu0
        %v1068 = vadd.f32 0.0, %v1067
        %v1069 = vpop.f32.mrb[0].mxu0
        %1070 = vmatprep.mubr.bf16.mxu0 0
        %1071 = vmatmul.mubr.bf16.gmra.mrb[0].mxu0 %v741
        %v1072 = vpop.f32.mrb[0].mxu0
        %v1073 = vadd.f32 0.0, %v1072
        %v1074 = vpop.f32.mrb[0].mxu0
        %v1075 = vpop.f32.mrb[0].mxu0
        %v1076 = vadd.f32 0.0, %v1075
        %v1077 = vpop.f32.mrb[0].mxu0
        %1078 = vmatprep.mubr.bf16.mxu0 0
        %1079 = vmatmul.mubr.bf16.gmra.mrb[0].mxu0 %v744
        %v1080 = vpop.f32.mrb[0].mxu0
        %v1081 = vadd.f32 0.0, %v1080
        %v1082 = vpop.f32.mrb[0].mxu0
        %v1083 = vpop.f32.mrb[0].mxu0
        %v1084 = vadd.f32 0.0, %v1083
        %v1085 = vpop.f32.mrb[0].mxu0
        %1086 = vmatprep.mubr.bf16.mxu0 0
        %1087 = vmatmul.mubr.bf16.gmra.mrb[0].mxu0 %v747
        %v1088 = vpop.f32.mrb[0].mxu0
        %v1089 = vadd.f32 0.0, %v1088
        %v1090 = vpop.f32.mrb[0].mxu0
        %v1091 = vpop.f32.mrb[0].mxu0
        %v1092 = vadd.f32 0.0, %v1091
        %v1093 = vpop.f32.mrb[0].mxu0
        %1094 = vmatprep.mubr.bf16.mxu0 0
        %1095 = vmatmul.mubr.bf16.gmra.mrb[0].mxu0 %v750
        %v1096 = vpop.f32.mrb[0].mxu0
        %v1097 = vadd.f32 0.0, %v1096
        %v1098 = vpop.f32.mrb[0].mxu0
        %v1099 = vpop.f32.mrb[0].mxu0
        %v1100 = vadd.f32 0.0, %v1099
        %v1101 = vpop.f32.mrb[0].mxu0
        %1102 = vmatprep.mubr.bf16.mxu0 0
        %1103 = vmatmul.mubr.bf16.gmra.mrb[0].mxu0 %v753
        %v1104 = vpop.f32.mrb[0].mxu0
        %v1105 = vadd.f32 0.0, %v1104
        %v1106 = vpop.f32.mrb[0].mxu0
        %v1107 = vpop.f32.mrb[0].mxu0
        %v1108 = vadd.f32 0.0, %v1107
        %v1109 = vpop.f32.mrb[0].mxu0
        %1110 = vmatprep.mubr.bf16.mxu0 0
        %1111 = vmatmul.mubr.bf16.gmra.mrb[0].mxu0 %v756
        %v1112 = vpop.f32.mrb[0].mxu0
        %v1113 = vadd.f32 0.0, %v1112
        %v1114 = vpop.f32.mrb[0].mxu0
        %v1115 = vpop.f32.mrb[0].mxu0
        %v1116 = vadd.f32 0.0, %v1115
        %v1117 = vpop.f32.mrb[0].mxu0
        %1118 = vmatprep.mubr.bf16.mxu0 0
        %1119 = vmatmul.mubr.bf16.gmra.mrb[0].mxu0 %v759
        %v1120 = vpop.f32.mrb[0].mxu0
        %v1121 = vadd.f32 0.0, %v1120
        %v1122 = vpop.f32.mrb[0].mxu0
        %v1123 = vpop.f32.mrb[0].mxu0
        %v1124 = vadd.f32 0.0, %v1123
        %v1125 = vpop.f32.mrb[0].mxu0
        %1126 = vmatprep.mubr.bf16.mxu0 0
        %1127 = vmatmul.mubr.bf16.gmra.mrb[0].mxu0 %v762
        %v1128 = vpop.f32.mrb[0].mxu0
        %v1129 = vadd.f32 0.0, %v1128
        %v1130 = vpop.f32.mrb[0].mxu0
        %v1131 = vpop.f32.mrb[0].mxu0
        %v1132 = vadd.f32 0.0, %v1131
        %v1133 = vpop.f32.mrb[0].mxu0
        %1134 = vmatprep.mubr.bf16.mxu0 0
        %1135 = vmatmul.mubr.bf16.gmra.mrb[0].mxu0 %v765
        %v1136 = vpop.f32.mrb[0].mxu0
        %v1137 = vadd.f32 0.0, %v1136
        %v1138 = vpop.f32.mrb[0].mxu0
        %v1139 = vpop.f32.mrb[0].mxu0
        %v1140 = vadd.f32 0.0, %v1139
        %v1141 = vpop.f32.mrb[0].mxu0
        %1142 = vmatprep.mubr.bf16.mxu0 0
        %1143 = vmatmul.mubr.bf16.gmra.mrb[0].mxu0 %v768
        %v1144 = vpop.f32.mrb[0].mxu0
        %v1145 = vadd.f32 0.0, %v1144
        %v1146 = vpop.f32.mrb[0].mxu0
        %v1147 = vpop.f32.mrb[0].mxu0
        %v1148 = vadd.f32 0.0, %v1147
        %v1149 = vpop.f32.mrb[0].mxu0
        %1150 = vmatprep.mubr.bf16.mxu0 0
        %1151 = vmatmul.mubr.bf16.gmra.mrb[0].mxu0 %v771
        %v1152 = vpop.f32.mrb[0].mxu0
        %v1153 = vadd.f32 0.0, %v1152
        %v1154 = vpop.f32.mrb[0].mxu0
        %v1155 = vpop.f32.mrb[0].mxu0
        %v1156 = vadd.f32 0.0, %v1155
        %v1157 = vpop.f32.mrb[0].mxu0
        %1158 = vmatprep.mubr.bf16.mxu0 0
        %1159 = vmatmul.mubr.bf16.gmra.mrb[0].mxu0 %v774
        %v1160 = vpop.f32.mrb[0].mxu0
        %v1161 = vadd.f32 0.0, %v1160
        %v1162 = vpop.f32.mrb[0].mxu0
        %v1163 = vpop.f32.mrb[0].mxu0
        %v1164 = vadd.f32 0.0, %v1163
        %v1165 = vpop.f32.mrb[0].mxu0
        %1166 = vmatprep.mubr.bf16.mxu0 0
        %1167 = vmatmul.mubr.bf16.gmra.mrb[0].mxu0 %v777
        %v1168 = vpop.f32.mrb[0].mxu0
        %v1169 = vadd.f32 0.0, %v1168
        %v1170 = vpop.f32.mrb[0].mxu0
        %v1171 = vpop.f32.mrb[0].mxu0
        %v1172 = vadd.f32 0.0, %v1171
        %v1173 = vpop.f32.mrb[0].mxu0
        %1174 = vmatprep.mubr.bf16.mxu0 0
        %1175 = vmatmul.mubr.bf16.gmra.mrb[0].mxu0 %v780
        %v1176 = vpop.f32.mrb[0].mxu0
        %v1177 = vadd.f32 0.0, %v1176
        %v1178 = vpop.f32.mrb[0].mxu0
        %v1179 = vpop.f32.mrb[0].mxu0
        %v1180 = vadd.f32 0.0, %v1179
        %v1181 = vpop.f32.mrb[0].mxu0
        %1182 = vmatprep.mubr.bf16.mxu0 0
        %1183 = vmatmul.mubr.bf16.gmra.mrb[0].mxu0 %v783
        %v1184 = vpop.f32.mrb[0].mxu0
        %v1185 = vadd.f32 0.0, %v1184
        %v1186 = vpop.f32.mrb[0].mxu0
        %v1187 = vpop.f32.mrb[0].mxu0
        %v1188 = vadd.f32 0.0, %v1187
        %v1189 = vpop.f32.mrb[0].mxu0
        %1190 = vmatprep.mubr.bf16.mxu0 0
        %1191 = vmatmul.mubr.bf16.gmra.mrb[0].mxu0 %v786
        %v1192 = vpop.f32.mrb[0].mxu0
        %v1193 = vadd.f32 0.0, %v1192
        %v1194 = vpop.f32.mrb[0].mxu0
        %v1195 = vpop.f32.mrb[0].mxu0
        %v1196 = vadd.f32 0.0, %v1195
        %v1197 = vpop.f32.mrb[0].mxu0
        %1198 = vmatprep.mubr.bf16.mxu0 0
        %1199 = vmatmul.mubr.bf16.gmra.mrb[0].mxu0 %v789
        %v1200 = vpop.f32.mrb[0].mxu0
        %v1201 = vadd.f32 0.0, %v1200
        %v1202 = vpop.f32.mrb[0].mxu0
        %v1203 = vpop.f32.mrb[0].mxu0
        %v1204 = vadd.f32 0.0, %v1203
        %v1205 = vpop.f32.mrb[0].mxu0
        %1206 = vmatprep.mubr.bf16.mxu0 0
        %1207 = vmatmul.mubr.bf16.gmra.mrb[0].mxu0 %v792
        %v1208 = vpop.f32.mrb[0].mxu0
        %v1209 = vadd.f32 0.0, %v1208
        %v1210 = vpop.f32.mrb[0].mxu0
        %v1211 = vpop.f32.mrb[0].mxu0
        %v1212 = vadd.f32 0.0, %v1211
        %v1213 = vpop.f32.mrb[0].mxu0
        %1214 = vmatprep.mubr.bf16.mxu0 0
        %1215 = vmatmul.mubr.bf16.gmra.mrb[0].mxu0 %v795
        %v1216 = vpop.f32.mrb[0].mxu0
        %v1217 = vadd.f32 0.0, %v1216
        %v1218 = vpop.f32.mrb[0].mxu0
        %v1219 = vpop.f32.mrb[0].mxu0
        %v1220 = vadd.f32 0.0, %v1219
        %v1221 = vpop.f32.mrb[0].mxu0
        %1222 = vdwg.mxu0
        %s1223 = sld [smem:[#allocation8 + %s30]]
        %s1224 = sld [smem:[#allocation9 + %s30]]
        %v1225 = vstv %s1223
        %v1226 = vmul.f32 %v832, %v1225
        %v1227 = vmul.f32 %v834, %v1225
        %v1228 = vmul.f32 %v1065, %v1225
        %v1229 = vmul.f32 %v836, %v1225
        %v1230 = vmul.f32 %v838, %v1225
        %v1231 = vmul.f32 %v1068, %v1225
        %v1232 = vmul.f32 %v842, %v1225
        %v1233 = vmul.f32 %v844, %v1225
        %v1234 = vmul.f32 %v1073, %v1225
        %v1235 = vmul.f32 %v846, %v1225
        %v1236 = vmul.f32 %v848, %v1225
        %v1237 = vmul.f32 %v1076, %v1225
        %v1238 = vmul.f32 %v852, %v1225
        %v1239 = vmul.f32 %v854, %v1225
        %v1240 = vmul.f32 %v1081, %v1225
        %v1241 = vmul.f32 %v856, %v1225
        %v1242 = vmul.f32 %v858, %v1225
        %v1243 = vmul.f32 %v1084, %v1225
        %v1244 = vmul.f32 %v862, %v1225
        %v1245 = vmul.f32 %v864, %v1225
        %v1246 = vmul.f32 %v1089, %v1225
        %v1247 = vmul.f32 %v866, %v1225
        %v1248 = vmul.f32 %v868, %v1225
        %v1249 = vmul.f32 %v1092, %v1225
        %v1250 = vmul.f32 %v872, %v1225
        %v1251 = vmul.f32 %v874, %v1225
        %v1252 = vmul.f32 %v1097, %v1225
        %v1253 = vmul.f32 %v876, %v1225
        %v1254 = vmul.f32 %v878, %v1225
        %v1255 = vmul.f32 %v1100, %v1225
        %v1256 = vmul.f32 %v882, %v1225
        %v1257 = vmul.f32 %v884, %v1225
        %v1258 = vmul.f32 %v1105, %v1225
        %v1259 = vmul.f32 %v886, %v1225
        %v1260 = vmul.f32 %v888, %v1225
        %v1261 = vmul.f32 %v1108, %v1225
        %v1262 = vmul.f32 %v892, %v1225
        %v1263 = vmul.f32 %v894, %v1225
        %v1264 = vmul.f32 %v1113, %v1225
        %v1265 = vmul.f32 %v896, %v1225
        %v1266 = vmul.f32 %v898, %v1225
        %v1267 = vmul.f32 %v1116, %v1225
        %v1268 = vmul.f32 %v902, %v1225
        %v1269 = vmul.f32 %v904, %v1225
        %v1270 = vmul.f32 %v1121, %v1225
        %v1271 = vmul.f32 %v906, %v1225
        %v1272 = vmul.f32 %v908, %v1225
        %v1273 = vmul.f32 %v1124, %v1225
        %v1274 = vmul.f32 %v912, %v1225
        %v1275 = vmul.f32 %v914, %v1225
        %v1276 = vmul.f32 %v1129, %v1225
        %v1277 = vmul.f32 %v916, %v1225
        %v1278 = vmul.f32 %v918, %v1225
        %v1279 = vmul.f32 %v1132, %v1225
        %v1280 = vmul.f32 %v922, %v1225
        %v1281 = vmul.f32 %v924, %v1225
        %v1282 = vmul.f32 %v1137, %v1225
        %v1283 = vmul.f32 %v926, %v1225
        %v1284 = vmul.f32 %v928, %v1225
        %v1285 = vmul.f32 %v1140, %v1225
        %v1286 = vmul.f32 %v932, %v1225
        %v1287 = vmul.f32 %v934, %v1225
        %v1288 = vmul.f32 %v1145, %v1225
        %v1289 = vmul.f32 %v936, %v1225
        %v1290 = vmul.f32 %v938, %v1225
        %v1291 = vmul.f32 %v1148, %v1225
        %v1292 = vmul.f32 %v942, %v1225
        %v1293 = vmul.f32 %v944, %v1225
        %v1294 = vmul.f32 %v1153, %v1225
        %v1295 = vmul.f32 %v946, %v1225
        %v1296 = vmul.f32 %v948, %v1225
        %v1297 = vmul.f32 %v1156, %v1225
        %v1298 = vmul.f32 %v952, %v1225
        %v1299 = vmul.f32 %v954, %v1225
        %v1300 = vmul.f32 %v1161, %v1225
        %v1301 = vmul.f32 %v956, %v1225
        %v1302 = vmul.f32 %v958, %v1225
        %v1303 = vmul.f32 %v1164, %v1225
        %v1304 = vmul.f32 %v962, %v1225
        %v1305 = vmul.f32 %v964, %v1225
        %v1306 = vmul.f32 %v1169, %v1225
        %v1307 = vmul.f32 %v966, %v1225
        %v1308 = vmul.f32 %v968, %v1225
        %v1309 = vmul.f32 %v1172, %v1225
        %v1310 = vmul.f32 %v972, %v1225
        %v1311 = vmul.f32 %v974, %v1225
        %v1312 = vmul.f32 %v1177, %v1225
        %v1313 = vmul.f32 %v976, %v1225
        %v1314 = vmul.f32 %v978, %v1225
        %v1315 = vmul.f32 %v1180, %v1225
        %v1316 = vmul.f32 %v982, %v1225
        %v1317 = vmul.f32 %v984, %v1225
        %v1318 = vmul.f32 %v1185, %v1225
        %v1319 = vmul.f32 %v986, %v1225
        %v1320 = vmul.f32 %v988, %v1225
        %v1321 = vmul.f32 %v1188, %v1225
        %v1322 = vmul.f32 %v992, %v1225
        %v1323 = vmul.f32 %v994, %v1225
        %v1324 = vmul.f32 %v1193, %v1225
        %v1325 = vmul.f32 %v996, %v1225
        %v1326 = vmul.f32 %v998, %v1225
        %v1327 = vmul.f32 %v1196, %v1225
        %v1328 = vmul.f32 %v1002, %v1225
        %v1329 = vmul.f32 %v1004, %v1225
        %v1330 = vmul.f32 %v1201, %v1225
        %v1331 = vmul.f32 %v1006, %v1225
        %v1332 = vmul.f32 %v1008, %v1225
        %v1333 = vmul.f32 %v1204, %v1225
        %v1334 = vmul.f32 %v1012, %v1225
        %v1335 = vmul.f32 %v1014, %v1225
        %v1336 = vmul.f32 %v1209, %v1225
        %v1337 = vmul.f32 %v1016, %v1225
        %v1338 = vmul.f32 %v1018, %v1225
        %v1339 = vmul.f32 %v1212, %v1225
        %v1340 = vmul.f32 %v1022, %v1225
        %v1341 = vmul.f32 %v1024, %v1225
        %v1342 = vmul.f32 %v1217, %v1225
        %v1343 = vmul.f32 %v1026, %v1225
        %v1344 = vmul.f32 %v1028, %v1225
        %v1345 = vmul.f32 %v1220, %v1225
        %v1346 = vstv %s1224
        %v1347 = vadd.f32 %v1226, %v1346
        %v1348 = vadd.f32 %v1227, %v1346
        %v1349 = vadd.f32 %v1228, %v1346
        %v1350 = vadd.f32 %v1229, %v1346
        %v1351 = vadd.f32 %v1230, %v1346
        %v1352 = vadd.f32 %v1231, %v1346
        %v1353 = vadd.f32 %v1232, %v1346
        %v1354 = vadd.f32 %v1233, %v1346
        %v1355 = vadd.f32 %v1234, %v1346
        %v1356 = vadd.f32 %v1235, %v1346
        %v1357 = vadd.f32 %v1236, %v1346
        %v1358 = vadd.f32 %v1237, %v1346
        %v1359 = vadd.f32 %v1238, %v1346
        %v1360 = vadd.f32 %v1239, %v1346
        %v1361 = vadd.f32 %v1240, %v1346
        %v1362 = vadd.f32 %v1241, %v1346
        %v1363 = vadd.f32 %v1242, %v1346
        %v1364 = vadd.f32 %v1243, %v1346
        %v1365 = vadd.f32 %v1244, %v1346
        %v1366 = vadd.f32 %v1245, %v1346
        %v1367 = vadd.f32 %v1246, %v1346
        %v1368 = vadd.f32 %v1247, %v1346
        %v1369 = vadd.f32 %v1248, %v1346
        %v1370 = vadd.f32 %v1249, %v1346
        %v1371 = vadd.f32 %v1250, %v1346
        %v1372 = vadd.f32 %v1251, %v1346
        %v1373 = vadd.f32 %v1252, %v1346
        %v1374 = vadd.f32 %v1253, %v1346
        %v1375 = vadd.f32 %v1254, %v1346
        %v1376 = vadd.f32 %v1255, %v1346
        %v1377 = vadd.f32 %v1256, %v1346
        %v1378 = vadd.f32 %v1257, %v1346
        %v1379 = vadd.f32 %v1258, %v1346
        %v1380 = vadd.f32 %v1259, %v1346
        %v1381 = vadd.f32 %v1260, %v1346
        %v1382 = vadd.f32 %v1261, %v1346
        %v1383 = vadd.f32 %v1262, %v1346
        %v1384 = vadd.f32 %v1263, %v1346
        %v1385 = vadd.f32 %v1264, %v1346
        %v1386 = vadd.f32 %v1265, %v1346
        %v1387 = vadd.f32 %v1266, %v1346
        %v1388 = vadd.f32 %v1267, %v1346
        %v1389 = vadd.f32 %v1268, %v1346
        %v1390 = vadd.f32 %v1269, %v1346
        %v1391 = vadd.f32 %v1270, %v1346
        %v1392 = vadd.f32 %v1271, %v1346
        %v1393 = vadd.f32 %v1272, %v1346
        %v1394 = vadd.f32 %v1273, %v1346
        %v1395 = vadd.f32 %v1274, %v1346
        %v1396 = vadd.f32 %v1275, %v1346
        %v1397 = vadd.f32 %v1276, %v1346
        %v1398 = vadd.f32 %v1277, %v1346
        %v1399 = vadd.f32 %v1278, %v1346
        %v1400 = vadd.f32 %v1279, %v1346
        %v1401 = vadd.f32 %v1280, %v1346
        %v1402 = vadd.f32 %v1281, %v1346
        %v1403 = vadd.f32 %v1282, %v1346
        %v1404 = vadd.f32 %v1283, %v1346
        %v1405 = vadd.f32 %v1284, %v1346
        %v1406 = vadd.f32 %v1285, %v1346
        %v1407 = vadd.f32 %v1286, %v1346
        %v1408 = vadd.f32 %v1287, %v1346
        %v1409 = vadd.f32 %v1288, %v1346
        %v1410 = vadd.f32 %v1289, %v1346
        %v1411 = vadd.f32 %v1290, %v1346
        %v1412 = vadd.f32 %v1291, %v1346
        %v1413 = vadd.f32 %v1292, %v1346
        %v1414 = vadd.f32 %v1293, %v1346
        %v1415 = vadd.f32 %v1294, %v1346
        %v1416 = vadd.f32 %v1295, %v1346
        %v1417 = vadd.f32 %v1296, %v1346
        %v1418 = vadd.f32 %v1297, %v1346
        %v1419 = vadd.f32 %v1298, %v1346
        %v1420 = vadd.f32 %v1299, %v1346
        %v1421 = vadd.f32 %v1300, %v1346
        %v1422 = vadd.f32 %v1301, %v1346
        %v1423 = vadd.f32 %v1302, %v1346
        %v1424 = vadd.f32 %v1303, %v1346
        %v1425 = vadd.f32 %v1304, %v1346
        %v1426 = vadd.f32 %v1305, %v1346
        %v1427 = vadd.f32 %v1306, %v1346
        %v1428 = vadd.f32 %v1307, %v1346
        %v1429 = vadd.f32 %v1308, %v1346
        %v1430 = vadd.f32 %v1309, %v1346
        %v1431 = vadd.f32 %v1310, %v1346
        %v1432 = vadd.f32 %v1311, %v1346
        %v1433 = vadd.f32 %v1312, %v1346
        %v1434 = vadd.f32 %v1313, %v1346
        %v1435 = vadd.f32 %v1314, %v1346
        %v1436 = vadd.f32 %v1315, %v1346
        %v1437 = vadd.f32 %v1316, %v1346
        %v1438 = vadd.f32 %v1317, %v1346
        %v1439 = vadd.f32 %v1318, %v1346
        %v1440 = vadd.f32 %v1319, %v1346
        %v1441 = vadd.f32 %v1320, %v1346
        %v1442 = vadd.f32 %v1321, %v1346
        %v1443 = vadd.f32 %v1322, %v1346
        %v1444 = vadd.f32 %v1323, %v1346
        %v1445 = vadd.f32 %v1324, %v1346
        %v1446 = vadd.f32 %v1325, %v1346
        %v1447 = vadd.f32 %v1326, %v1346
        %v1448 = vadd.f32 %v1327, %v1346
        %v1449 = vadd.f32 %v1328, %v1346
        %v1450 = vadd.f32 %v1329, %v1346
        %v1451 = vadd.f32 %v1330, %v1346
        %v1452 = vadd.f32 %v1331, %v1346
        %v1453 = vadd.f32 %v1332, %v1346
        %v1454 = vadd.f32 %v1333, %v1346
        %v1455 = vadd.f32 %v1334, %v1346
        %v1456 = vadd.f32 %v1335, %v1346
        %v1457 = vadd.f32 %v1336, %v1346
        %v1458 = vadd.f32 %v1337, %v1346
        %v1459 = vadd.f32 %v1338, %v1346
        %v1460 = vadd.f32 %v1339, %v1346
        %v1461 = vadd.f32 %v1340, %v1346
        %v1462 = vadd.f32 %v1341, %v1346
        %v1463 = vadd.f32 %v1342, %v1346
        %v1464 = vadd.f32 %v1343, %v1346
        %v1465 = vadd.f32 %v1344, %v1346
        %v1466 = vadd.f32 %v1345, %v1346
        %1467 = vst [vmem:[%s298] sm:$0xff] %v1347
        %1468 = vst [vmem:[%s298 + $0x8] sm:$0xff] %v1348
        %vm1469 = vcmask 523264
        %1470 = vst.msk [vmem:[%s298 + $0x10] sm:$0xff] %vm1469, %v1349
        %1471 = vst [vmem:[%s298 + $0x18] sm:$0xff] %v1350
        %1472 = vst [vmem:[%s298 + $0x20] sm:$0xff] %v1351
        %1473 = vst.msk [vmem:[%s298 + $0x28] sm:$0xff] %vm1469, %v1352
        %1474 = vst [vmem:[%s298 + $0x30] sm:$0xff] %v1353
        %1475 = vst [vmem:[%s298 + $0x38] sm:$0xff] %v1354
        %1476 = vst.msk [vmem:[%s298 + $0x40] sm:$0xff] %vm1469, %v1355
        %1477 = vst [vmem:[%s298 + $0x48] sm:$0xff] %v1356
        %1478 = vst [vmem:[%s298 + $0x50] sm:$0xff] %v1357
        %1479 = vst.msk [vmem:[%s298 + $0x58] sm:$0xff] %vm1469, %v1358
        %1480 = vst [vmem:[%s298 + $0x60] sm:$0xff] %v1359
        %1481 = vst [vmem:[%s298 + $0x68] sm:$0xff] %v1360
        %1482 = vst.msk [vmem:[%s298 + $0x70] sm:$0xff] %vm1469, %v1361
        %1483 = vst [vmem:[%s298 + $0x78] sm:$0xff] %v1362
        %1484 = vst [vmem:[%s298 + $0x80] sm:$0xff] %v1363
        %1485 = vst.msk [vmem:[%s298 + $0x88] sm:$0xff] %vm1469, %v1364
        %1486 = vst [vmem:[%s298 + $0x90] sm:$0xff] %v1365
        %1487 = vst [vmem:[%s298 + $0x98] sm:$0xff] %v1366
        %1488 = vst.msk [vmem:[%s298 + $0xa0] sm:$0xff] %vm1469, %v1367
        %1489 = vst [vmem:[%s298 + $0xa8] sm:$0xff] %v1368
        %1490 = vst [vmem:[%s298 + $0xb0] sm:$0xff] %v1369
        %1491 = vst.msk [vmem:[%s298 + $0xb8] sm:$0xff] %vm1469, %v1370
        %1492 = vst [vmem:[%s298 + $0xc0] sm:$0xff] %v1371
        %1493 = vst [vmem:[%s298 + $0xc8] sm:$0xff] %v1372
        %1494 = vst.msk [vmem:[%s298 + $0xd0] sm:$0xff] %vm1469, %v1373
        %1495 = vst [vmem:[%s298 + $0xd8] sm:$0xff] %v1374
        %1496 = vst [vmem:[%s298 + $0xe0] sm:$0xff] %v1375
        %1497 = vst.msk [vmem:[%s298 + $0xe8] sm:$0xff] %vm1469, %v1376
        %1498 = vst [vmem:[%s298 + $0xf0] sm:$0xff] %v1377
        %1499 = vst [vmem:[%s298 + $0xf8] sm:$0xff] %v1378
        %1500 = vst.msk [vmem:[%s298 + $0x100] sm:$0xff] %vm1469, %v1379
        %1501 = vst [vmem:[%s298 + $0x108] sm:$0xff] %v1380
        %1502 = vst [vmem:[%s298 + $0x110] sm:$0xff] %v1381
        %1503 = vst.msk [vmem:[%s298 + $0x118] sm:$0xff] %vm1469, %v1382
        %1504 = vst [vmem:[%s298 + $0x120] sm:$0xff] %v1383
        %1505 = vst [vmem:[%s298 + $0x128] sm:$0xff] %v1384
        %1506 = vst.msk [vmem:[%s298 + $0x130] sm:$0xff] %vm1469, %v1385
        %1507 = vst [vmem:[%s298 + $0x138] sm:$0xff] %v1386
        %1508 = vst [vmem:[%s298 + $0x140] sm:$0xff] %v1387
        %1509 = vst.msk [vmem:[%s298 + $0x148] sm:$0xff] %vm1469, %v1388
        %1510 = vst [vmem:[%s298 + $0x150] sm:$0xff] %v1389
        %1511 = vst [vmem:[%s298 + $0x158] sm:$0xff] %v1390
        %1512 = vst.msk [vmem:[%s298 + $0x160] sm:$0xff] %vm1469, %v1391
        %1513 = vst [vmem:[%s298 + $0x168] sm:$0xff] %v1392
        %1514 = vst [vmem:[%s298 + $0x170] sm:$0xff] %v1393
        %1515 = vst.msk [vmem:[%s298 + $0x178] sm:$0xff] %vm1469, %v1394
        %1516 = vst [vmem:[%s298 + $0x180] sm:$0xff] %v1395
        %1517 = vst [vmem:[%s298 + $0x188] sm:$0xff] %v1396
        %1518 = vst.msk [vmem:[%s298 + $0x190] sm:$0xff] %vm1469, %v1397
        %1519 = vst [vmem:[%s298 + $0x198] sm:$0xff] %v1398
        %1520 = vst [vmem:[%s298 + $0x1a0] sm:$0xff] %v1399
        %1521 = vst.msk [vmem:[%s298 + $0x1a8] sm:$0xff] %vm1469, %v1400
        %1522 = vst [vmem:[%s298 + $0x1b0] sm:$0xff] %v1401
        %1523 = vst [vmem:[%s298 + $0x1b8] sm:$0xff] %v1402
        %1524 = vst.msk [vmem:[%s298 + $0x1c0] sm:$0xff] %vm1469, %v1403
        %1525 = vst [vmem:[%s298 + $0x1c8] sm:$0xff] %v1404
        %1526 = vst [vmem:[%s298 + $0x1d0] sm:$0xff] %v1405
        %1527 = vst.msk [vmem:[%s298 + $0x1d8] sm:$0xff] %vm1469, %v1406
        %1528 = vst [vmem:[%s298 + $0x1e0] sm:$0xff] %v1407
        %1529 = vst [vmem:[%s298 + $0x1e8] sm:$0xff] %v1408
        %1530 = vst.msk [vmem:[%s298 + $0x1f0] sm:$0xff] %vm1469, %v1409
        %1531 = vst [vmem:[%s298 + $0x1f8] sm:$0xff] %v1410
        %1532 = vst [vmem:[%s298 + $0x200] sm:$0xff] %v1411
        %1533 = vst.msk [vmem:[%s298 + $0x208] sm:$0xff] %vm1469, %v1412
        %1534 = vst [vmem:[%s298 + $0x210] sm:$0xff] %v1413
        %1535 = vst [vmem:[%s298 + $0x218] sm:$0xff] %v1414
        %1536 = vst.msk [vmem:[%s298 + $0x220] sm:$0xff] %vm1469, %v1415
        %1537 = vst [vmem:[%s298 + $0x228] sm:$0xff] %v1416
        %1538 = vst [vmem:[%s298 + $0x230] sm:$0xff] %v1417
        %1539 = vst.msk [vmem:[%s298 + $0x238] sm:$0xff] %vm1469, %v1418
        %1540 = vst [vmem:[%s298 + $0x240] sm:$0xff] %v1419
        %1541 = vst [vmem:[%s298 + $0x248] sm:$0xff] %v1420
        %1542 = vst.msk [vmem:[%s298 + $0x250] sm:$0xff] %vm1469, %v1421
        %1543 = vst [vmem:[%s298 + $0x258] sm:$0xff] %v1422
        %1544 = vst [vmem:[%s298 + $0x260] sm:$0xff] %v1423
        %1545 = vst.msk [vmem:[%s298 + $0x268] sm:$0xff] %vm1469, %v1424
        %1546 = vst [vmem:[%s298 + $0x270] sm:$0xff] %v1425
        %1547 = vst [vmem:[%s298 + $0x278] sm:$0xff] %v1426
        %1548 = vst.msk [vmem:[%s298 + $0x280] sm:$0xff] %vm1469, %v1427
        %1549 = vst [vmem:[%s298 + $0x288] sm:$0xff] %v1428
        %1550 = vst [vmem:[%s298 + $0x290] sm:$0xff] %v1429
        %1551 = vst.msk [vmem:[%s298 + $0x298] sm:$0xff] %vm1469, %v1430
        %1552 = vst [vmem:[%s298 + $0x2a0] sm:$0xff] %v1431
        %1553 = vst [vmem:[%s298 + $0x2a8] sm:$0xff] %v1432
        %1554 = vst.msk [vmem:[%s298 + $0x2b0] sm:$0xff] %vm1469, %v1433
        %1555 = vst [vmem:[%s298 + $0x2b8] sm:$0xff] %v1434
        %1556 = vst [vmem:[%s298 + $0x2c0] sm:$0xff] %v1435
        %1557 = vst.msk [vmem:[%s298 + $0x2c8] sm:$0xff] %vm1469, %v1436
        %1558 = vst [vmem:[%s298 + $0x2d0] sm:$0xff] %v1437
        %1559 = vst [vmem:[%s298 + $0x2d8] sm:$0xff] %v1438
        %1560 = vst.msk [vmem:[%s298 + $0x2e0] sm:$0xff] %vm1469, %v1439
        %1561 = vst [vmem:[%s298 + $0x2e8] sm:$0xff] %v1440
        %1562 = vst [vmem:[%s298 + $0x2f0] sm:$0xff] %v1441
        %1563 = vst.msk [vmem:[%s298 + $0x2f8] sm:$0xff] %vm1469, %v1442
        %1564 = vst [vmem:[%s298 + $0x300] sm:$0xff] %v1443
        %1565 = vst [vmem:[%s298 + $0x308] sm:$0xff] %v1444
        %1566 = vst.msk [vmem:[%s298 + $0x310] sm:$0xff] %vm1469, %v1445
        %1567 = vst [vmem:[%s298 + $0x318] sm:$0xff] %v1446
        %1568 = vst [vmem:[%s298 + $0x320] sm:$0xff] %v1447
        %1569 = vst.msk [vmem:[%s298 + $0x328] sm:$0xff] %vm1469, %v1448
        %1570 = vst [vmem:[%s298 + $0x330] sm:$0xff] %v1449
        %1571 = vst [vmem:[%s298 + $0x338] sm:$0xff] %v1450
        %1572 = vst.msk [vmem:[%s298 + $0x340] sm:$0xff] %vm1469, %v1451
        %1573 = vst [vmem:[%s298 + $0x348] sm:$0xff] %v1452
        %1574 = vst [vmem:[%s298 + $0x350] sm:$0xff] %v1453
        %1575 = vst.msk [vmem:[%s298 + $0x358] sm:$0xff] %vm1469, %v1454
        %1576 = vst [vmem:[%s298 + $0x360] sm:$0xff] %v1455
        %1577 = vst [vmem:[%s298 + $0x368] sm:$0xff] %v1456
        %1578 = vst.msk [vmem:[%s298 + $0x370] sm:$0xff] %vm1469, %v1457
        %1579 = vst [vmem:[%s298 + $0x378] sm:$0xff] %v1458
        %1580 = vst [vmem:[%s298 + $0x380] sm:$0xff] %v1459
        %1581 = vst.msk [vmem:[%s298 + $0x388] sm:$0xff] %vm1469, %v1460
        %1582 = vst [vmem:[%s298 + $0x390] sm:$0xff] %v1461
        %1583 = vst [vmem:[%s298 + $0x398] sm:$0xff] %v1462
        %1584 = vst.msk [vmem:[%s298 + $0x3a0] sm:$0xff] %vm1469, %v1463
        %1585 = vst [vmem:[%s298 + $0x3a8] sm:$0xff] %v1464
        %1586 = vst [vmem:[%s298 + $0x3b0] sm:$0xff] %v1465
        %1587 = vst.msk [vmem:[%s298 + $0x3b8] sm:$0xff] %vm1469, %v1466
        %s1588 = sand.u32 %s159, 1
        %s1589 = scalar_lea.sflag [#allocation4], %s1588
        %s1590 = sand.u32 %s159, 1
        %s1591 = smul.addr %s1590, 960
        %s1592 = scalar_lea.vmem [#allocation11], %s1591
        // Predicated region
        $region57: #{tpu_custom_call.1} parent=39 // pred_check
          %p1593 = pneg %p169
        $region58: #{tpu_custom_call.1} parent=39 // pred_check_branch
          %1595 = sbr.rel (%p1593) target = $region60
        $region59: #{tpu_custom_call.1} parent=39 // pred_region
          %s1597 = ssub.s32 15360, 15360
          %1598 = vsyncadd %s1589, %s1597
          %s1599 = smul.addr %s30, 120
          %s1600 = smul.addr %s29, 360
          %s1601 = sadd.s32 %s1599, %s1600
          %s1602 = smul.addr %s1601, 128
          %s1603 = scalar_lea.hbm %s5, %s1602
          %s1604 = sshll.u32 %s1592, 4
          %s1605 = int_to_ptr.vmem [resolvable:$true] %s1604
          %1610 = dma.vmem_to_hbm [thread:$0]  %s1605, 15360, %s1603, %s1589, 384, 384, 24
        $region60: #{tpu_custom_call.1} parent=39 // pred_fallthru
          _
      $region40: #{tpu_custom_call.1} parent=5 // pred_fallthru
        _
      %p1611 = scmp.le.s32.totalorder 2, %s20
      // Predicated region
      $region61: #{tpu_custom_call.1} parent=5 // pred_check
        %p1612 = pneg %p1611
      $region62: #{tpu_custom_call.1} parent=5 // pred_check_branch
        %1614 = sbr.rel (%p1612) target = $region64
      $region63: #{tpu_custom_call.1} parent=5 // pred_region
        %s1615 = ssub.s32 %s20, 2
        // Predicated region
        $region65: #{tpu_custom_call.1} parent=63 // pred_check
          %p1616 = pneg %p175
        $region66: #{tpu_custom_call.1} parent=63 // pred_check_branch
          %1618 = sbr.rel (%p1616) target = $region68
        $region67: #{tpu_custom_call.1} parent=63 // pred_region
          %s1619 = sand.u32 %s160, 1
          %s1620 = scalar_lea.sflag [#allocation4], %s1619
          %s1621 = sand.u32 %s160, 1
          %s1622 = smul.addr %s1621, 960
          %s1623 = scalar_lea.vmem [#allocation11], %s1622
          %1624 = dma.done %s1620, 15360
        $region68: #{tpu_custom_call.1} parent=63 // pred_fallthru
          _
      $region64: #{tpu_custom_call.1} parent=5 // pred_fallthru
        _
    $region6: #{tpu_custom_call.1} parent=1 // loop_footer
      %s24 = sadd.s32 1, %s20
    $region7: #{tpu_custom_call.1} parent=1 // loop_footer_branch
      %19 = sbr.rel target = $region3
    $region8: #{tpu_custom_call.1} parent=1 // loop_exit
      _
    %1625 = vsyncpa [#allocation3], 1
    %s1626 = scalar_lea.sflag [#allocation3], 1
    %1627 = vsyncpa %s1626, 1
    %1628 = vsyncpa [#allocation7], 1
    %1629 = vsyncpa [#allocation4], 1
    %s1630 = scalar_lea.sflag [#allocation4], 1
    %1631 = vsyncpa %s1630, 1
    %1632 = vsyncpa [#allocation5], 1
    %s1633 = scalar_lea.sflag [#allocation5], 1
    %1634 = vsyncpa %s1633, 1
    %1635 = vsyncpa [#allocation10], 1

</llo_original>
